<compile_context>
chip_gen: v7x
topology: tpu7x:2x2x1
jax: 0.10.0
libtpu: 0.0.40
codegen_flags: <defaults>
</compile_context>

<pallas_src>
import jax
import jax.numpy as jnp
from jax.experimental import pallas as pl
from jax.experimental.pallas import tpu as pltpu

OBS_DIM = 24          # BipedalWalker observation_space.shape = (24,)
ACT_DIM = 4           # BipedalWalker action_space.shape = (4,)
FC1_DIMS = 1024
FC2_DIMS = 512
FC3_DIMS = 256
OUT_PAD = 128         # lane-dense output slab; mu lives in columns [:ACT_DIM]
LOG_STD_MIN = -20.0
LOG_STD_MAX = 2.0
STD_INIT = 0.5


def _round_up(n, m):
    return ((n + m - 1) // m) * m


def _choose_batch_tile(b8, batch_tile):
    """Pick the batch tile.

    For b8 >= 16 rows we keep at least 2 grid steps so the "parallel" grid axis
    can be split across both v7x TensorCores; otherwise (acting path, B<=8 or
    similar) a single step is optimal.
    """
    if b8 < 16:
        return b8
    return min(batch_tile, _round_up((b8 + 1) // 2, 8))


def actor_kernel(x_ref,
                 w1_ref, b1_ref,
                 w2_ref, b2_ref,
                 w3_ref, b3_ref,
                 w4_ref, b4_ref,
                 mu_ref):
    """relu(fc1) -> relu(fc2) -> relu(fc3) -> tanh(fc4).

    Weights are bf16 (MXU-native), matmuls accumulate in f32, bias-add stays
    f32; relu output is cast to bf16 to halve inter-layer VMEM traffic (the
    cast is a vcvt, so it's safe on v5e despite its lack of bf16 VALU).
    """
    h = jnp.dot(x_ref[...].astype(jnp.bfloat16), w1_ref[...],
                preferred_element_type=jnp.float32) + b1_ref[...]
    h = jnp.maximum(h, 0.0).astype(jnp.bfloat16)

    h = jnp.dot(h, w2_ref[...],
                preferred_element_type=jnp.float32) + b2_ref[...]
    h = jnp.maximum(h, 0.0).astype(jnp.bfloat16)

    h = jnp.dot(h, w3_ref[...],
                preferred_element_type=jnp.float32) + b3_ref[...]
    h = jnp.maximum(h, 0.0).astype(jnp.bfloat16)

    mu = jnp.tanh(jnp.dot(h, w4_ref[...],
                          preferred_element_type=jnp.float32) + b4_ref[...])
    mu_ref[...] = mu      # full 128-lane slab -> unmasked stores


def actor_forward(x, params, *, batch_tile=512):
    """Returns (mu, std) — parameters of torch.distributions.Normal(mu, std)."""
    B = x.shape[0]
    b8 = _round_up(max(B, 1), 8)
    tb = _choose_batch_tile(b8, batch_tile)
    b_pad = _round_up(b8, tb)
    if b_pad != B:
        x = jnp.pad(x, ((0, b_pad - B), (0, 0)))
    nb = b_pad // tb

    # w4/b4 are already stored lane-padded to OUT_PAD in init_params.
    weight_args = (params["w1"], params["b1"],
                   params["w2"], params["b2"],
                   params["w3"], params["b3"],
                   params["w4"], params["b4"])

    # weights: constant block index across the batch grid -> stay VMEM-resident
    const_spec = lambda a: pl.BlockSpec(a.shape, lambda i: (0, 0))

    flops = 2 * b_pad * (OBS_DIM * FC1_DIMS + FC1_DIMS * FC2_DIMS
                         + FC2_DIMS * FC3_DIMS + FC3_DIMS * OUT_PAD)
    bytes_accessed = (sum(a.size * a.dtype.itemsize for a in weight_args)
                      + x.size * x.dtype.itemsize
                      + b_pad * OUT_PAD * 4)

    mu_pad = pl.pallas_call(
        actor_kernel,
        out_shape=jax.ShapeDtypeStruct((b_pad, OUT_PAD), jnp.float32),
        grid=(nb,),
        in_specs=[pl.BlockSpec((tb, OBS_DIM), lambda i: (i, 0))]
                 + [const_spec(a) for a in weight_args],
        out_specs=pl.BlockSpec((tb, OUT_PAD), lambda i: (i, 0)),
        compiler_params=pltpu.CompilerParams(
            dimension_semantics=("parallel",),
            vmem_limit_bytes=32 * 1024 * 1024),
        cost_estimate=pl.CostEstimate(
            flops=flops,
            transcendentals=b_pad * OUT_PAD,
            bytes_accessed=bytes_accessed),
    )(x, *weight_args)

    mu = mu_pad[:B, :ACT_DIM]

    # std depends only on log_std (not on x) -> compute in the wrapper
    log_std = jnp.clip(params["log_std"], LOG_STD_MIN, LOG_STD_MAX)
    std = jnp.broadcast_to(jnp.exp(log_std), mu.shape)   # expand_as(mu)
    return mu, std


def init_params(key):
    """PyTorch nn.Linear-style init: W, b ~ U(-1/sqrt(fan_in), 1/sqrt(fan_in)).

    Weights stored [in, out] in bfloat16; biases / log_std in f32. The last
    layer (w4/b4) is stored zero-padded from ACT_DIM to OUT_PAD output lanes so
    the kernel's output slab is lane-dense with no per-call padding.
    """
    dims = [(OBS_DIM, FC1_DIMS), (FC1_DIMS, FC2_DIMS),
            (FC2_DIMS, FC3_DIMS), (FC3_DIMS, ACT_DIM)]
    params = {}
    keys = jax.random.split(key, 2 * len(dims))
    for i, (fan_in, fan_out) in enumerate(dims):
        bound = 1.0 / (fan_in ** 0.5)
        w = jax.random.uniform(keys[2 * i], (fan_in, fan_out),
                               jnp.float32, -bound, bound)
        b = jax.random.uniform(keys[2 * i + 1], (1, fan_out),
                               jnp.float32, -bound, bound)
        if fan_out == ACT_DIM:  # last layer: pad once at init time
            w = jnp.pad(w, ((0, 0), (0, OUT_PAD - ACT_DIM)))
            b = jnp.pad(b, ((0, 0), (0, OUT_PAD - ACT_DIM)))
        params[f"w{i+1}"] = w.astype(jnp.bfloat16)
        params[f"b{i+1}"] = b
    # self.log_std = nn.Parameter(torch.ones(1, act_dim) * 0.5)
    params["log_std"] = jnp.full((1, ACT_DIM), STD_INIT, dtype=jnp.float32)
    return params


def ref_forward(x, params):
    """Pure-JAX reference using the same bf16-weight / f32-accumulate math."""
    h = x.astype(jnp.bfloat16)
    for i in (1, 2, 3):
        acc = jnp.dot(h, params[f"w{i}"],
                      preferred_element_type=jnp.float32) + params[f"b{i}"]
        h = jnp.maximum(acc, 0.0).astype(jnp.bfloat16)
    mu = jnp.tanh(jnp.dot(h, params["w4"],
                          preferred_element_type=jnp.float32) + params["b4"])
    mu = mu[:, :ACT_DIM]
    std = jnp.broadcast_to(
        jnp.exp(jnp.clip(params["log_std"], LOG_STD_MIN, LOG_STD_MAX)), mu.shape)
    return mu, std


# TODO(synk): torch.distributions.Normal object construction is host-side;
# the kernel returns (mu, std) which fully parameterize it.

if __name__ == "__main__":
    key = jax.random.PRNGKey(0)
    pkey, xkey = jax.random.split(key)
    params = init_params(pkey)

    fwd = jax.jit(actor_forward)

    # small acting-loop batch (single grid step)
    B = 8
    x = jax.random.normal(xkey, (B, OBS_DIM), dtype=jnp.float32)
    mu, std = fwd(x, params)
    jax.block_until_ready((mu, std))
    mu_r, std_r = ref_forward(x, params)
    assert mu.shape == (B, ACT_DIM) and std.shape == (B, ACT_DIM)
    assert jnp.allclose(mu, mu_r, atol=2e-3), "mu mismatch (B=8)"
    assert jnp.allclose(std, std_r, atol=1e-6), "std mismatch (B=8)"

    # batch that exercises the batch grid (nb=2 tiles + row padding)
    B2 = 300
    x2 = jax.random.normal(jax.random.PRNGKey(1), (B2, OBS_DIM), dtype=jnp.float32)
    mu2, std2 = fwd(x2, params)
    jax.block_until_ready((mu2, std2))
    mu2_r, std2_r = ref_forward(x2, params)
    assert mu2.shape == (B2, ACT_DIM) and std2.shape == (B2, ACT_DIM)
    assert jnp.allclose(mu2, mu2_r, atol=2e-3), "mu mismatch (B=300)"
    assert jnp.allclose(std2, std2_r, atol=1e-6), "std mismatch (B=300)"

    print("KERNEL_OK")
</pallas_src>

<mosaic_0001>
module attributes {stable_mosaic.version = 11 : i64} {
  func.func @actor_kernel(%arg0: i32, %arg1: memref<8x24xf32, #tpu.memory_space<vmem>>, %arg2: memref<24x1024xbf16, #tpu.memory_space<vmem>>, %arg3: memref<1x1024xf32, #tpu.memory_space<vmem>>, %arg4: memref<1024x512xbf16, #tpu.memory_space<vmem>>, %arg5: memref<1x512xf32, #tpu.memory_space<vmem>>, %arg6: memref<512x256xbf16, #tpu.memory_space<vmem>>, %arg7: memref<1x256xf32, #tpu.memory_space<vmem>>, %arg8: memref<256x128xbf16, #tpu.memory_space<vmem>>, %arg9: memref<1x128xf32, #tpu.memory_space<vmem>>, %arg10: memref<8x128xf32, #tpu.memory_space<vmem>>) attributes {dimension_semantics = [#tpu.dimension_semantics<parallel>], iteration_bounds = array<i64: 1>, scalar_prefetch = 0 : i64, scratch_operands = 0 : i64, tpu.core_type = #tpu.core_type<tc>, window_params = [{transform_indices = @transform_0, window_bounds = array<i64: 8, 24>}, {pipeline_mode = #tpu.pipeline_mode<synchronous>, transform_indices = @transform_1, window_bounds = array<i64: 24, 1024>}, {pipeline_mode = #tpu.pipeline_mode<synchronous>, transform_indices = @transform_2, window_bounds = array<i64: 1, 1024>}, {pipeline_mode = #tpu.pipeline_mode<synchronous>, transform_indices = @transform_3, window_bounds = array<i64: 1024, 512>}, {pipeline_mode = #tpu.pipeline_mode<synchronous>, transform_indices = @transform_4, window_bounds = array<i64: 1, 512>}, {pipeline_mode = #tpu.pipeline_mode<synchronous>, transform_indices = @transform_5, window_bounds = array<i64: 512, 256>}, {pipeline_mode = #tpu.pipeline_mode<synchronous>, transform_indices = @transform_6, window_bounds = array<i64: 1, 256>}, {pipeline_mode = #tpu.pipeline_mode<synchronous>, transform_indices = @transform_7, window_bounds = array<i64: 256, 128>}, {pipeline_mode = #tpu.pipeline_mode<synchronous>, transform_indices = @transform_8, window_bounds = array<i64: 1, 128>}, {transform_indices = @transform_9, window_bounds = array<i64: 8, 128>}]} {
    %c0 = arith.constant 0 : index
    %c0_0 = arith.constant 0 : index
    %0 = vector.load %arg1[%c0, %c0_0] : memref<8x24xf32, #tpu.memory_space<vmem>>, vector<8x24xf32>
    %1 = arith.truncf %0 : vector<8x24xf32> to vector<8x24xbf16>
    %c0_1 = arith.constant 0 : index
    %c0_2 = arith.constant 0 : index
    %2 = vector.load %arg2[%c0_1, %c0_2] : memref<24x1024xbf16, #tpu.memory_space<vmem>>, vector<24x1024xbf16>
    %cst = arith.constant dense<0.000000e+00> : vector<8x1024xf32>
    %3 = tpu.matmul %1, %2, %cst {dimension_numbers = #tpu.dot_dimension_numbers<[1], [0], [0], [1], [0, 0, 1, 1], [], []>} : vector<8x24xbf16>, vector<24x1024xbf16>, vector<8x1024xf32> -> vector<8x1024xf32>
    %c0_3 = arith.constant 0 : index
    %c0_4 = arith.constant 0 : index
    %4 = vector.load %arg3[%c0_3, %c0_4] : memref<1x1024xf32, #tpu.memory_space<vmem>>, vector<1x1024xf32>
    %5 = vector.broadcast %4 : vector<1x1024xf32> to vector<8x1024xf32>
    %6 = arith.addf %3, %5 : vector<8x1024xf32>
    %cst_5 = arith.constant 0.000000e+00 : f32
    %7 = vector.broadcast %cst_5 : f32 to vector<8x1024xf32>
    %8 = arith.maximumf %6, %7 : vector<8x1024xf32>
    %9 = arith.truncf %8 : vector<8x1024xf32> to vector<8x1024xbf16>
    %c0_6 = arith.constant 0 : index
    %c0_7 = arith.constant 0 : index
    %10 = vector.load %arg4[%c0_6, %c0_7] : memref<1024x512xbf16, #tpu.memory_space<vmem>>, vector<1024x512xbf16>
    %cst_8 = arith.constant dense<0.000000e+00> : vector<8x512xf32>
    %11 = tpu.matmul %9, %10, %cst_8 {dimension_numbers = #tpu.dot_dimension_numbers<[1], [0], [0], [1], [0, 0, 1, 1], [], []>} : vector<8x1024xbf16>, vector<1024x512xbf16>, vector<8x512xf32> -> vector<8x512xf32>
    %c0_9 = arith.constant 0 : index
    %c0_10 = arith.constant 0 : index
    %12 = vector.load %arg5[%c0_9, %c0_10] : memref<1x512xf32, #tpu.memory_space<vmem>>, vector<1x512xf32>
    %13 = vector.broadcast %12 : vector<1x512xf32> to vector<8x512xf32>
    %14 = arith.addf %11, %13 : vector<8x512xf32>
    %cst_11 = arith.constant 0.000000e+00 : f32
    %15 = vector.broadcast %cst_11 : f32 to vector<8x512xf32>
    %16 = arith.maximumf %14, %15 : vector<8x512xf32>
    %17 = arith.truncf %16 : vector<8x512xf32> to vector<8x512xbf16>
    %c0_12 = arith.constant 0 : index
    %c0_13 = arith.constant 0 : index
    %18 = vector.load %arg6[%c0_12, %c0_13] : memref<512x256xbf16, #tpu.memory_space<vmem>>, vector<512x256xbf16>
    %cst_14 = arith.constant dense<0.000000e+00> : vector<8x256xf32>
    %19 = tpu.matmul %17, %18, %cst_14 {dimension_numbers = #tpu.dot_dimension_numbers<[1], [0], [0], [1], [0, 0, 1, 1], [], []>} : vector<8x512xbf16>, vector<512x256xbf16>, vector<8x256xf32> -> vector<8x256xf32>
    %c0_15 = arith.constant 0 : index
    %c0_16 = arith.constant 0 : index
    %20 = vector.load %arg7[%c0_15, %c0_16] : memref<1x256xf32, #tpu.memory_space<vmem>>, vector<1x256xf32>
    %21 = vector.broadcast %20 : vector<1x256xf32> to vector<8x256xf32>
    %22 = arith.addf %19, %21 : vector<8x256xf32>
    %cst_17 = arith.constant 0.000000e+00 : f32
    %23 = vector.broadcast %cst_17 : f32 to vector<8x256xf32>
    %24 = arith.maximumf %22, %23 : vector<8x256xf32>
    %25 = arith.truncf %24 : vector<8x256xf32> to vector<8x256xbf16>
    %c0_18 = arith.constant 0 : index
    %c0_19 = arith.constant 0 : index
    %26 = vector.load %arg8[%c0_18, %c0_19] : memref<256x128xbf16, #tpu.memory_space<vmem>>, vector<256x128xbf16>
    %cst_20 = arith.constant dense<0.000000e+00> : vector<8x128xf32>
    %27 = tpu.matmul %25, %26, %cst_20 {dimension_numbers = #tpu.dot_dimension_numbers<[1], [0], [0], [1], [0, 0, 1, 1], [], []>} : vector<8x256xbf16>, vector<256x128xbf16>, vector<8x128xf32> -> vector<8x128xf32>
    %c0_21 = arith.constant 0 : index
    %c0_22 = arith.constant 0 : index
    %28 = vector.load %arg9[%c0_21, %c0_22] : memref<1x128xf32, #tpu.memory_space<vmem>>, vector<1x128xf32>
    %29 = vector.broadcast %28 : vector<1x128xf32> to vector<8x128xf32>
    %30 = arith.addf %27, %29 : vector<8x128xf32>
    %31 = math.tanh %30 : vector<8x128xf32>
    %c0_23 = arith.constant 0 : index
    %c0_24 = arith.constant 0 : index
    %32 = vector.load %arg10[%c0_23, %c0_24] : memref<8x128xf32, #tpu.memory_space<vmem>>, vector<8x128xf32>
    tpu.vector_store %arg10[%c0_23, %c0_24], %31 {strides = array<i32>} : memref<8x128xf32, #tpu.memory_space<vmem>>, vector<8x128xf32>,
    return
  }
  func.func @transform_0(%arg0: i32) -> (i32, i32) {
    %c0_i32 = arith.constant 0 : i32
    %c0_i32_0 = arith.constant 0 : i32
    return %arg0, %c0_i32 : i32, i32
  }
  func.func @transform_1(%arg0: i32) -> (i32, i32) {
    %c0_i32 = arith.constant 0 : i32
    %c0_i32_0 = arith.constant 0 : i32
    %c0_i32_1 = arith.constant 0 : i32
    return %c0_i32, %c0_i32_0 : i32, i32
  }
  func.func @transform_2(%arg0: i32) -> (i32, i32) {
    %c0_i32 = arith.constant 0 : i32
    %c0_i32_0 = arith.constant 0 : i32
    %c0_i32_1 = arith.constant 0 : i32
    return %c0_i32, %c0_i32_0 : i32, i32
  }
  func.func @transform_3(%arg0: i32) -> (i32, i32) {
    %c0_i32 = arith.constant 0 : i32
    %c0_i32_0 = arith.constant 0 : i32
    %c0_i32_1 = arith.constant 0 : i32
    return %c0_i32, %c0_i32_0 : i32, i32
  }
  func.func @transform_4(%arg0: i32) -> (i32, i32) {
    %c0_i32 = arith.constant 0 : i32
    %c0_i32_0 = arith.constant 0 : i32
    %c0_i32_1 = arith.constant 0 : i32
    return %c0_i32, %c0_i32_0 : i32, i32
  }
  func.func @transform_5(%arg0: i32) -> (i32, i32) {
    %c0_i32 = arith.constant 0 : i32
    %c0_i32_0 = arith.constant 0 : i32
    %c0_i32_1 = arith.constant 0 : i32
    return %c0_i32, %c0_i32_0 : i32, i32
  }
  func.func @transform_6(%arg0: i32) -> (i32, i32) {
    %c0_i32 = arith.constant 0 : i32
    %c0_i32_0 = arith.constant 0 : i32
    %c0_i32_1 = arith.constant 0 : i32
    return %c0_i32, %c0_i32_0 : i32, i32
  }
  func.func @transform_7(%arg0: i32) -> (i32, i32) {
    %c0_i32 = arith.constant 0 : i32
    %c0_i32_0 = arith.constant 0 : i32
    %c0_i32_1 = arith.constant 0 : i32
    return %c0_i32, %c0_i32_0 : i32, i32
  }
  func.func @transform_8(%arg0: i32) -> (i32, i32) {
    %c0_i32 = arith.constant 0 : i32
    %c0_i32_0 = arith.constant 0 : i32
    %c0_i32_1 = arith.constant 0 : i32
    return %c0_i32, %c0_i32_0 : i32, i32
  }
  func.func @transform_9(%arg0: i32) -> (i32, i32) {
    %c0_i32 = arith.constant 0 : i32
    %c0_i32_0 = arith.constant 0 : i32
    return %arg0, %c0_i32 : i32, i32
  }
}

</mosaic_0001>

<llo_original>
// kernel: actor_forward.1
$region0: #{actor_forward.1}
  #allocation0 [shape = 'u32[]', space=smem, size = 0x4, offset = 0x4, fixed_abs, tag = 'smem constant byte address 0x4 - core index']
  #allocation1 [shape = 'u32[144,128]{1,0:T(1,128)}', space=vmem, size = 0x12000, scoped, tag = 'internal scratch']
  %s0 = inlined_call_operand.hbm [shape: f32[8,24], index: 0, kind: input, shape index: {}]
  %s1 = inlined_call_operand.hbm [shape: bf16[24,1024], index: 1, kind: input, shape index: {}]
  %s2 = inlined_call_operand.vmem [shape: f32[1,1024], index: 2, kind: input, shape index: {}]
  %s3 = inlined_call_operand.hbm [shape: bf16[1024,512], index: 3, kind: input, shape index: {}]
  %s4 = inlined_call_operand.vmem [shape: f32[1,512], index: 4, kind: input, shape index: {}]
  %s5 = inlined_call_operand.hbm [shape: bf16[512,256], index: 5, kind: input, shape index: {}]
  %s6 = inlined_call_operand.vmem [shape: f32[1,256], index: 6, kind: input, shape index: {}]
  %s7 = inlined_call_operand.hbm [shape: bf16[256,128], index: 7, kind: input, shape index: {}]
  %s8 = inlined_call_operand.vmem [shape: f32[1,128], index: 8, kind: input, shape index: {}]
  %s9 = inlined_call_operand.vmem [shape: f32[8,128], index: 9, kind: output, shape index: {}]
  %s10 = sld [smem:[#allocation0]]
  $region66: #{actor_forward.1} parent=0
    _
  %s12 = ssub.s32 1, %s10
  %s13 = scalar_select 0, %s12, %s10
  $region1: #{actor_forward.1} parent=0
    #allocation2 [shape = 'u8[4096]{0}', space=vmem, size = 0x1000, scoped, tag = 'input window, operand 0, single buffered']
    #allocation3 [shape = 's32[1]{0}', space=sflag, size = 0x4, scoped, tag = 'scoped memory for actor_forward.1']
    #allocation4 [shape = 'u8[49152]{0}', space=vmem, size = 0xc000, scoped, tag = 'input window, operand 1, single buffered']
    #allocation5 [shape = 's32[1]{0}', space=sflag, size = 0x4, scoped, tag = 'scoped memory for actor_forward.1']
    #allocation6 [shape = 'u8[1048576]{0}', space=vmem, size = 0x100000, scoped, tag = 'input window, operand 3, single buffered']
    #allocation7 [shape = 'u8[262144]{0}', space=vmem, size = 0x40000, scoped, tag = 'input window, operand 5, single buffered']
    #allocation8 [shape = 's32[1]{0}', space=sflag, size = 0x4, scoped, tag = 'scoped memory for actor_forward.1']
    #allocation9 [shape = 'u8[65536]{0}', space=vmem, size = 0x10000, scoped, tag = 'input window, operand 7, single buffered']
    %14 = vsyncpa [#allocation3], 0
    %15 = vsyncpa [#allocation5], 0
    %16 = vsyncpa [#allocation8], 0
    // Predicated region
    $region2: #{actor_forward.1} parent=1 // pred_check
      _
    $region3: #{actor_forward.1} parent=1 // pred_check_branch
      %18 = sbr.rel (0) target = $region5
    $region4: #{actor_forward.1} parent=1 // pred_region
      %s20 = ssub.s32 128, 128
      %21 = vsyncadd [#allocation3], %s20
      %s23 = sshll.u32 [#allocation2], 4
      %s24 = int_to_ptr.vmem [resolvable:$true] %s23
      %26 = dma.hbm_to_vmem [thread:$0]  %s0, 128, %s24, [#allocation3]
    $region5: #{actor_forward.1} parent=1 // pred_fallthru
      _
    // Predicated region
    $region6: #{actor_forward.1} parent=1 // pred_check
      _
    $region7: #{actor_forward.1} parent=1 // pred_check_branch
      %28 = sbr.rel (0) target = $region9
    $region8: #{actor_forward.1} parent=1 // pred_region
      %s30 = ssub.s32 1536, 1536
      %31 = vsyncadd [#allocation5], %s30
      %s32 = sshll.u32 [#allocation4], 4
      %s33 = int_to_ptr.vmem [resolvable:$true] %s32
      %38 = dma.hbm_to_vmem [thread:$0]  %s1, 1536, %s33, [#allocation5], 512, 512, 32
    $region9: #{actor_forward.1} parent=1 // pred_fallthru
      _
    // Predicated region
    $region10: #{actor_forward.1} parent=1 // pred_check
      _
    $region11: #{actor_forward.1} parent=1 // pred_check_branch
      %40 = sbr.rel (0) target = $region13
    $region12: #{actor_forward.1} parent=1 // pred_region
      _
    $region13: #{actor_forward.1} parent=1 // pred_fallthru
      _
    // Predicated region
    $region14: #{actor_forward.1} parent=1 // pred_check
      _
    $region15: #{actor_forward.1} parent=1 // pred_check_branch
      %42 = sbr.rel (0) target = $region17
    $region16: #{actor_forward.1} parent=1 // pred_region
      %s44 = ssub.s32 32768, 32768
      %45 = vsyncadd [#allocation5], %s44
      %s46 = sshll.u32 [#allocation6], 4
      %s47 = int_to_ptr.vmem [resolvable:$true] %s46
      %52 = dma.hbm_to_vmem [thread:$0]  %s3, 32768, %s47, [#allocation5], 256, 256, 16
    $region17: #{actor_forward.1} parent=1 // pred_fallthru
      _
    // Predicated region
    $region18: #{actor_forward.1} parent=1 // pred_check
      _
    $region19: #{actor_forward.1} parent=1 // pred_check_branch
      %54 = sbr.rel (0) target = $region21
    $region20: #{actor_forward.1} parent=1 // pred_region
      _
    $region21: #{actor_forward.1} parent=1 // pred_fallthru
      _
    // Predicated region
    $region22: #{actor_forward.1} parent=1 // pred_check
      _
    $region23: #{actor_forward.1} parent=1 // pred_check_branch
      %56 = sbr.rel (0) target = $region25
    $region24: #{actor_forward.1} parent=1 // pred_region
      %s58 = ssub.s32 8192, 8192
      %59 = vsyncadd [#allocation8], %s58
      %s60 = sshll.u32 [#allocation7], 4
      %s61 = int_to_ptr.vmem [resolvable:$true] %s60
      %66 = dma.hbm_to_vmem [thread:$0]  %s5, 8192, %s61, [#allocation8], 128, 128, 8
    $region25: #{actor_forward.1} parent=1 // pred_fallthru
      _
    // Predicated region
    $region26: #{actor_forward.1} parent=1 // pred_check
      _
    $region27: #{actor_forward.1} parent=1 // pred_check_branch
      %68 = sbr.rel (0) target = $region29
    $region28: #{actor_forward.1} parent=1 // pred_region
      _
    $region29: #{actor_forward.1} parent=1 // pred_fallthru
      _
    // Predicated region
    $region30: #{actor_forward.1} parent=1 // pred_check
      _
    $region31: #{actor_forward.1} parent=1 // pred_check_branch
      %70 = sbr.rel (0) target = $region33
    $region32: #{actor_forward.1} parent=1 // pred_region
      %s72 = ssub.s32 2048, 2048
      %73 = vsyncadd [#allocation8], %s72
      %s74 = sshll.u32 [#allocation9], 4
      %s75 = int_to_ptr.vmem [resolvable:$true] %s74
      %80 = dma.hbm_to_vmem [thread:$0]  %s7, 2048, %s75, [#allocation8], 64, 64, 4
    $region33: #{actor_forward.1} parent=1 // pred_fallthru
      _
    // Predicated region
    $region34: #{actor_forward.1} parent=1 // pred_check
      _
    $region35: #{actor_forward.1} parent=1 // pred_check_branch
      %82 = sbr.rel (0) target = $region37
    $region36: #{actor_forward.1} parent=1 // pred_region
      _
    $region37: #{actor_forward.1} parent=1 // pred_fallthru
      _
    // Predicated region
    $region38: #{actor_forward.1} parent=1 // pred_check
      _
    $region39: #{actor_forward.1} parent=1 // pred_check_branch
      %84 = sbr.rel (0) target = $region41
    $region40: #{actor_forward.1} parent=1 // pred_region
      %85 = dma.done [#allocation3], 128
    $region41: #{actor_forward.1} parent=1 // pred_fallthru
      _
    // Predicated region
    $region42: #{actor_forward.1} parent=1 // pred_check
      _
    $region43: #{actor_forward.1} parent=1 // pred_check_branch
      %87 = sbr.rel (0) target = $region45
    $region44: #{actor_forward.1} parent=1 // pred_region
      %88 = dma.done [#allocation5], 1536
    $region45: #{actor_forward.1} parent=1 // pred_fallthru
      _
    // Predicated region
    $region46: #{actor_forward.1} parent=1 // pred_check
      _
    $region47: #{actor_forward.1} parent=1 // pred_check_branch
      %90 = sbr.rel (0) target = $region49
    $region48: #{actor_forward.1} parent=1 // pred_region
      %91 = dma.done [#allocation5], 32768
    $region49: #{actor_forward.1} parent=1 // pred_fallthru
      _
    // Predicated region
    $region50: #{actor_forward.1} parent=1 // pred_check
      _
    $region51: #{actor_forward.1} parent=1 // pred_check_branch
      %93 = sbr.rel (0) target = $region53
    $region52: #{actor_forward.1} parent=1 // pred_region
      %94 = dma.done [#allocation8], 8192
    $region53: #{actor_forward.1} parent=1 // pred_fallthru
      _
    // Predicated region
    $region54: #{actor_forward.1} parent=1 // pred_check
      _
    $region55: #{actor_forward.1} parent=1 // pred_check_branch
      %96 = sbr.rel (0) target = $region57
    $region56: #{actor_forward.1} parent=1 // pred_region
      %97 = dma.done [#allocation8], 2048
    $region57: #{actor_forward.1} parent=1 // pred_fallthru
      _
    %v99 = vld [vmem:[#allocation2] sm:$0xff]
    %v100 = vpack.c.bf16 %v99, %v99
    %v101 = vld [vmem:[#allocation4] sm:$0xff]
    %v102 = vld [vmem:[#allocation4 + $0x8] sm:$0xff]
    %v103 = vld [vmem:[#allocation4 + $0x10] sm:$0xff]
    %v104 = vld [vmem:[#allocation4 + $0x18] sm:$0xff]
    %v105 = vld [vmem:[#allocation4 + $0x20] sm:$0xff]
    %v106 = vld [vmem:[#allocation4 + $0x28] sm:$0xff]
    %v107 = vld [vmem:[#allocation4 + $0x30] sm:$0xff]
    %v108 = vld [vmem:[#allocation4 + $0x38] sm:$0xff]
    %v109 = vld [vmem:[#allocation4 + $0x40] sm:$0xff]
    %v110 = vld [vmem:[#allocation4 + $0x48] sm:$0xff]
    %v111 = vld [vmem:[#allocation4 + $0x50] sm:$0xff]
    %v112 = vld [vmem:[#allocation4 + $0x58] sm:$0xff]
    %v113 = vld [vmem:[%s2] sm:$0xff]
    %v115 = vlaneseq
    %v116 = vshrl.u32 %v115, 7
    %v117 = vsub.s32 0, %v116
    %v118 = vrot.slane %v113, %v117
    %v119 = vlaneseq
    %v120 = vshrl.u32 %v119, 7
    %v121 = vsub.s32 1, %v120
    %v122 = vrot.slane %v113, %v121
    %v123 = vlaneseq
    %v124 = vshrl.u32 %v123, 7
    %v125 = vsub.s32 2, %v124
    %v126 = vrot.slane %v113, %v125
    %v127 = vlaneseq
    %v128 = vshrl.u32 %v127, 7
    %v129 = vsub.s32 3, %v128
    %v130 = vrot.slane %v113, %v129
    %v131 = vlaneseq
    %v132 = vshrl.u32 %v131, 7
    %v133 = vsub.s32 4, %v132
    %v134 = vrot.slane %v113, %v133
    %v135 = vlaneseq
    %v136 = vshrl.u32 %v135, 7
    %v137 = vsub.s32 5, %v136
    %v138 = vrot.slane %v113, %v137
    %v139 = vlaneseq
    %v140 = vshrl.u32 %v139, 7
    %v141 = vsub.s32 6, %v140
    %v142 = vrot.slane %v113, %v141
    %v143 = vlaneseq
    %v144 = vshrl.u32 %v143, 7
    %v145 = vsub.s32 7, %v144
    %v146 = vrot.slane %v113, %v145
    %v167 = vunpack.c.l.b16 %v101
    %v168 = vunpack.c.h.b16 %v101
    %v169 = vunpack.c.l.b16 %v102
    %v170 = vunpack.c.h.b16 %v102
    %v171 = vunpack.c.l.b16 %v103
    %v172 = vunpack.c.h.b16 %v103
    %v173 = vunpack.c.l.b16 %v104
    %v174 = vunpack.c.h.b16 %v104
    %v175 = vunpack.c.l.b16 %v105
    %v176 = vunpack.c.h.b16 %v105
    %v177 = vunpack.c.l.b16 %v106
    %v178 = vunpack.c.h.b16 %v106
    %v179 = vunpack.c.l.b16 %v107
    %v180 = vunpack.c.h.b16 %v107
    %v181 = vunpack.c.l.b16 %v108
    %v182 = vunpack.c.h.b16 %v108
    %v183 = vunpack.c.l.b16 %v109
    %v184 = vunpack.c.h.b16 %v109
    %v185 = vunpack.c.l.b16 %v110
    %v186 = vunpack.c.h.b16 %v110
    %v187 = vunpack.c.l.b16 %v111
    %v188 = vunpack.c.h.b16 %v111
    %v189 = vunpack.c.l.b16 %v112
    %v190 = vunpack.c.h.b16 %v112
    %v191 = vpack.c.b16 %v175, %v167
    %v192 = vpack.c.b16 %v176, %v168
    %v193 = vpack.c.b16 %v177, %v169
    %v194 = vpack.c.b16 %v178, %v170
    %v195 = vpack.c.b16 %v179, %v171
    %v196 = vpack.c.b16 %v180, %v172
    %v197 = vpack.c.b16 %v181, %v173
    %v198 = vpack.c.b16 %v182, %v174
    %v199 = vpack.c.b16 %v183, %v183
    %v200 = vpack.c.b16 %v184, %v184
    %v201 = vpack.c.b16 %v185, %v185
    %v202 = vpack.c.b16 %v186, %v186
    %v203 = vpack.c.b16 %v187, %v187
    %v204 = vpack.c.b16 %v188, %v188
    %v205 = vpack.c.b16 %v189, %v189
    %v206 = vpack.c.b16 %v190, %v190
    %vm215 = vcmask 195584
    %v217 = vsel %vm215, %v100, 0
    %vm219 = vcmask 1043456
    %v221 = vsel %vm219, %v199, 0
    %v224 = vsel %vm219, %v200, 0
    %v227 = vsel %vm219, %v201, 0
    %v230 = vsel %vm219, %v202, 0
    %v233 = vsel %vm219, %v203, 0
    %v236 = vsel %vm219, %v204, 0
    %v239 = vsel %vm219, %v205, 0
    %v242 = vsel %vm219, %v206, 0
    %244 = vmatprep.subr.bf16.mxu0 %v192
    %245 = vmatpush1.bf16.msra.mxu0 %v191
    %246 = vmatprep.subr.bf16.mxu0 %v224
    %247 = vmatpush1.bf16.msra.mxu0 %v221
    %248 = vmatprep.subr.bf16.mxu0 0
    %249 = vmatpush1.bf16.msra.mxu0 0
    %250 = vmatprep.subr.bf16.mxu0 0
    %251 = vmatpush1.bf16.msra.mxu0 0
    %252 = vmatprep.subr.bf16.mxu0 0
    %253 = vmatpush1.bf16.msra.mxu0 0
    %254 = vmatprep.subr.bf16.mxu0 0
    %255 = vmatpush1.bf16.msra.mxu0 0
    %256 = vmatprep.subr.bf16.mxu0 0
    %257 = vmatpush1.bf16.msra.mxu0 0
    %258 = vmatprep.subr.bf16.mxu0 0
    %259 = vmatpush1.bf16.msra.mxu0 0
    %260 = vmatprep.subr.bf16.mxu0 0
    %261 = vmatpush1.bf16.msra.mxu0 0
    %262 = vmatprep.subr.bf16.mxu0 0
    %263 = vmatpush1.bf16.msra.mxu0 0
    %264 = vmatprep.subr.bf16.mxu0 0
    %265 = vmatpush1.bf16.msra.mxu0 0
    %266 = vmatprep.subr.bf16.mxu0 0
    %267 = vmatpush1.bf16.msra.mxu0 0
    %268 = vmatprep.subr.bf16.mxu0 0
    %269 = vmatpush1.bf16.msra.mxu0 0
    %270 = vmatprep.subr.bf16.mxu0 0
    %271 = vmatpush1.bf16.msra.mxu0 0
    %272 = vmatprep.subr.bf16.mxu0 0
    %273 = vmatpush1.bf16.msra.mxu0 0
    %274 = vmatprep.subr.bf16.mxu0 0
    %275 = vmatpush1.bf16.msra.mxu0 0
    %276 = vmatprep.mubr.bf16.mxu0 0
    %277 = vmatmul.mubr.bf16.gmra.mrb[0].mxu0 %v217
    %v278 = vpop.f32.mrb[0].mxu0
    %v279 = vadd.f32 %v118, %v278
    %v280 = vpop.f32.mrb[0].mxu0
    %v281 = vadd.f32 %v122, %v280
    %v282 = vpop.f32.mrb[0].mxu0
    %v283 = vpop.f32.mrb[0].mxu0
    %284 = vdwg.mxu0
    %285 = vmatprep.subr.bf16.mxu0 %v194
    %286 = vmatpush1.bf16.msra.mxu0 %v193
    %287 = vmatprep.subr.bf16.mxu0 %v230
    %288 = vmatpush1.bf16.msra.mxu0 %v227
    %289 = vmatprep.subr.bf16.mxu0 0
    %290 = vmatpush1.bf16.msra.mxu0 0
    %291 = vmatprep.subr.bf16.mxu0 0
    %292 = vmatpush1.bf16.msra.mxu0 0
    %293 = vmatprep.subr.bf16.mxu0 0
    %294 = vmatpush1.bf16.msra.mxu0 0
    %295 = vmatprep.subr.bf16.mxu0 0
    %296 = vmatpush1.bf16.msra.mxu0 0
    %297 = vmatprep.subr.bf16.mxu0 0
    %298 = vmatpush1.bf16.msra.mxu0 0
    %299 = vmatprep.subr.bf16.mxu0 0
    %300 = vmatpush1.bf16.msra.mxu0 0
    %301 = vmatprep.subr.bf16.mxu0 0
    %302 = vmatpush1.bf16.msra.mxu0 0
    %303 = vmatprep.subr.bf16.mxu0 0
    %304 = vmatpush1.bf16.msra.mxu0 0
    %305 = vmatprep.subr.bf16.mxu0 0
    %306 = vmatpush1.bf16.msra.mxu0 0
    %307 = vmatprep.subr.bf16.mxu0 0
    %308 = vmatpush1.bf16.msra.mxu0 0
    %309 = vmatprep.subr.bf16.mxu0 0
    %310 = vmatpush1.bf16.msra.mxu0 0
    %311 = vmatprep.subr.bf16.mxu0 0
    %312 = vmatpush1.bf16.msra.mxu0 0
    %313 = vmatprep.subr.bf16.mxu0 0
    %314 = vmatpush1.bf16.msra.mxu0 0
    %315 = vmatprep.subr.bf16.mxu0 0
    %316 = vmatpush1.bf16.msra.mxu0 0
    %317 = vmatprep.mubr.bf16.mxu0 0
    %318 = vmatmul.mubr.bf16.gmra.mrb[0].mxu0 %v217
    %v319 = vpop.f32.mrb[0].mxu0
    %v320 = vadd.f32 %v126, %v319
    %v321 = vpop.f32.mrb[0].mxu0
    %v322 = vadd.f32 %v130, %v321
    %v323 = vpop.f32.mrb[0].mxu0
    %v324 = vpop.f32.mrb[0].mxu0
    %325 = vdwg.mxu0
    %326 = vmatprep.subr.bf16.mxu0 %v196
    %327 = vmatpush1.bf16.msra.mxu0 %v195
    %328 = vmatprep.subr.bf16.mxu0 %v236
    %329 = vmatpush1.bf16.msra.mxu0 %v233
    %330 = vmatprep.subr.bf16.mxu0 0
    %331 = vmatpush1.bf16.msra.mxu0 0
    %332 = vmatprep.subr.bf16.mxu0 0
    %333 = vmatpush1.bf16.msra.mxu0 0
    %334 = vmatprep.subr.bf16.mxu0 0
    %335 = vmatpush1.bf16.msra.mxu0 0
    %336 = vmatprep.subr.bf16.mxu0 0
    %337 = vmatpush1.bf16.msra.mxu0 0
    %338 = vmatprep.subr.bf16.mxu0 0
    %339 = vmatpush1.bf16.msra.mxu0 0
    %340 = vmatprep.subr.bf16.mxu0 0
    %341 = vmatpush1.bf16.msra.mxu0 0
    %342 = vmatprep.subr.bf16.mxu0 0
    %343 = vmatpush1.bf16.msra.mxu0 0
    %344 = vmatprep.subr.bf16.mxu0 0
    %345 = vmatpush1.bf16.msra.mxu0 0
    %346 = vmatprep.subr.bf16.mxu0 0
    %347 = vmatpush1.bf16.msra.mxu0 0
    %348 = vmatprep.subr.bf16.mxu0 0
    %349 = vmatpush1.bf16.msra.mxu0 0
    %350 = vmatprep.subr.bf16.mxu0 0
    %351 = vmatpush1.bf16.msra.mxu0 0
    %352 = vmatprep.subr.bf16.mxu0 0
    %353 = vmatpush1.bf16.msra.mxu0 0
    %354 = vmatprep.subr.bf16.mxu0 0
    %355 = vmatpush1.bf16.msra.mxu0 0
    %356 = vmatprep.subr.bf16.mxu0 0
    %357 = vmatpush1.bf16.msra.mxu0 0
    %358 = vmatprep.mubr.bf16.mxu0 0
    %359 = vmatmul.mubr.bf16.gmra.mrb[0].mxu0 %v217
    %v360 = vpop.f32.mrb[0].mxu0
    %v361 = vadd.f32 %v134, %v360
    %v362 = vpop.f32.mrb[0].mxu0
    %v363 = vadd.f32 %v138, %v362
    %v364 = vpop.f32.mrb[0].mxu0
    %v365 = vpop.f32.mrb[0].mxu0
    %366 = vdwg.mxu0
    %367 = vmatprep.subr.bf16.mxu0 %v198
    %368 = vmatpush1.bf16.msra.mxu0 %v197
    %369 = vmatprep.subr.bf16.mxu0 %v242
    %370 = vmatpush1.bf16.msra.mxu0 %v239
    %371 = vmatprep.subr.bf16.mxu0 0
    %372 = vmatpush1.bf16.msra.mxu0 0
    %373 = vmatprep.subr.bf16.mxu0 0
    %374 = vmatpush1.bf16.msra.mxu0 0
    %375 = vmatprep.subr.bf16.mxu0 0
    %376 = vmatpush1.bf16.msra.mxu0 0
    %377 = vmatprep.subr.bf16.mxu0 0
    %378 = vmatpush1.bf16.msra.mxu0 0
    %379 = vmatprep.subr.bf16.mxu0 0
    %380 = vmatpush1.bf16.msra.mxu0 0
    %381 = vmatprep.subr.bf16.mxu0 0
    %382 = vmatpush1.bf16.msra.mxu0 0
    %383 = vmatprep.subr.bf16.mxu0 0
    %384 = vmatpush1.bf16.msra.mxu0 0
    %385 = vmatprep.subr.bf16.mxu0 0
    %386 = vmatpush1.bf16.msra.mxu0 0
    %387 = vmatprep.subr.bf16.mxu0 0
    %388 = vmatpush1.bf16.msra.mxu0 0
    %389 = vmatprep.subr.bf16.mxu0 0
    %390 = vmatpush1.bf16.msra.mxu0 0
    %391 = vmatprep.subr.bf16.mxu0 0
    %392 = vmatpush1.bf16.msra.mxu0 0
    %393 = vmatprep.subr.bf16.mxu0 0
    %394 = vmatpush1.bf16.msra.mxu0 0
    %395 = vmatprep.subr.bf16.mxu0 0
    %396 = vmatpush1.bf16.msra.mxu0 0
    %397 = vmatprep.subr.bf16.mxu0 0
    %398 = vmatpush1.bf16.msra.mxu0 0
    %399 = vmatprep.mubr.bf16.mxu0 0
    %400 = vmatmul.mubr.bf16.gmra.mrb[0].mxu0 %v217
    %v401 = vpop.f32.mrb[0].mxu0
    %v402 = vadd.f32 %v142, %v401
    %v403 = vpop.f32.mrb[0].mxu0
    %v404 = vadd.f32 %v146, %v403
    %v405 = vpop.f32.mrb[0].mxu0
    %v406 = vpop.f32.mrb[0].mxu0
    %407 = vdwg.mxu0
    %v408 = vmax.f32 %v279, 0.0
    %v409 = vmax.f32 %v281, 0.0
    %v410 = vmax.f32 %v320, 0.0
    %v411 = vmax.f32 %v322, 0.0
    %v412 = vmax.f32 %v361, 0.0
    %v413 = vmax.f32 %v363, 0.0
    %v414 = vmax.f32 %v402, 0.0
    %v415 = vmax.f32 %v404, 0.0
    %v416 = vpack.c.bf16 %v408, %v408
    %v417 = vpack.c.bf16 %v409, %v409
    %v418 = vpack.c.bf16 %v410, %v410
    %v419 = vpack.c.bf16 %v411, %v411
    %v420 = vpack.c.bf16 %v412, %v412
    %v421 = vpack.c.bf16 %v413, %v413
    %v422 = vpack.c.bf16 %v414, %v414
    %v423 = vpack.c.bf16 %v415, %v415
    %v424 = vld [vmem:[#allocation6] sm:$0xff]
    %v425 = vld [vmem:[#allocation6 + $0x8] sm:$0xff]
    %v426 = vld [vmem:[#allocation6 + $0x10] sm:$0xff]
    %v427 = vld [vmem:[#allocation6 + $0x18] sm:$0xff]
    %v428 = vld [vmem:[#allocation6 + $0x20] sm:$0xff]
    %v429 = vld [vmem:[#allocation6 + $0x28] sm:$0xff]
    %v430 = vld [vmem:[#allocation6 + $0x30] sm:$0xff]
    %v431 = vld [vmem:[#allocation6 + $0x38] sm:$0xff]
    %v432 = vld [vmem:[#allocation6 + $0x40] sm:$0xff]
    %v433 = vld [vmem:[#allocation6 + $0x48] sm:$0xff]
    %v434 = vld [vmem:[#allocation6 + $0x50] sm:$0xff]
    %v435 = vld [vmem:[#allocation6 + $0x58] sm:$0xff]
    %v436 = vld [vmem:[#allocation6 + $0x60] sm:$0xff]
    %v437 = vld [vmem:[#allocation6 + $0x68] sm:$0xff]
    %v438 = vld [vmem:[#allocation6 + $0x70] sm:$0xff]
    %v439 = vld [vmem:[#allocation6 + $0x78] sm:$0xff]
    %v440 = vld [vmem:[#allocation6 + $0x80] sm:$0xff]
    %v441 = vld [vmem:[#allocation6 + $0x88] sm:$0xff]
    %v442 = vld [vmem:[#allocation6 + $0x90] sm:$0xff]
    %v443 = vld [vmem:[#allocation6 + $0x98] sm:$0xff]
    %v444 = vld [vmem:[#allocation6 + $0xa0] sm:$0xff]
    %v445 = vld [vmem:[#allocation6 + $0xa8] sm:$0xff]
    %v446 = vld [vmem:[#allocation6 + $0xb0] sm:$0xff]
    %v447 = vld [vmem:[#allocation6 + $0xb8] sm:$0xff]
    %v448 = vld [vmem:[#allocation6 + $0xc0] sm:$0xff]
    %v449 = vld [vmem:[#allocation6 + $0xc8] sm:$0xff]
    %v450 = vld [vmem:[#allocation6 + $0xd0] sm:$0xff]
    %v451 = vld [vmem:[#allocation6 + $0xd8] sm:$0xff]
    %v452 = vld [vmem:[#allocation6 + $0xe0] sm:$0xff]
    %v453 = vld [vmem:[#allocation6 + $0xe8] sm:$0xff]
    %v454 = vld [vmem:[#allocation6 + $0xf0] sm:$0xff]
    %v455 = vld [vmem:[#allocation6 + $0xf8] sm:$0xff]
    %v456 = vld [vmem:[#allocation6 + $0x100] sm:$0xff]
    %v457 = vld [vmem:[#allocation6 + $0x108] sm:$0xff]
    %v458 = vld [vmem:[#allocation6 + $0x110] sm:$0xff]
    %v459 = vld [vmem:[#allocation6 + $0x118] sm:$0xff]
    %v460 = vld [vmem:[#allocation6 + $0x120] sm:$0xff]
    %v461 = vld [vmem:[#allocation6 + $0x128] sm:$0xff]
    %v462 = vld [vmem:[#allocation6 + $0x130] sm:$0xff]
    %v463 = vld [vmem:[#allocation6 + $0x138] sm:$0xff]
    %v464 = vld [vmem:[#allocation6 + $0x140] sm:$0xff]
    %v465 = vld [vmem:[#allocation6 + $0x148] sm:$0xff]
    %v466 = vld [vmem:[#allocation6 + $0x150] sm:$0xff]
    %v467 = vld [vmem:[#allocation6 + $0x158] sm:$0xff]
    %v468 = vld [vmem:[#allocation6 + $0x160] sm:$0xff]
    %v469 = vld [vmem:[#allocation6 + $0x168] sm:$0xff]
    %v470 = vld [vmem:[#allocation6 + $0x170] sm:$0xff]
    %v471 = vld [vmem:[#allocation6 + $0x178] sm:$0xff]
    %v472 = vld [vmem:[#allocation6 + $0x180] sm:$0xff]
    %v473 = vld [vmem:[#allocation6 + $0x188] sm:$0xff]
    %v474 = vld [vmem:[#allocation6 + $0x190] sm:$0xff]
    %v475 = vld [vmem:[#allocation6 + $0x198] sm:$0xff]
    %v476 = vld [vmem:[#allocation6 + $0x1a0] sm:$0xff]
    %v477 = vld [vmem:[#allocation6 + $0x1a8] sm:$0xff]
    %v478 = vld [vmem:[#allocation6 + $0x1b0] sm:$0xff]
    %v479 = vld [vmem:[#allocation6 + $0x1b8] sm:$0xff]
    %v480 = vld [vmem:[#allocation6 + $0x1c0] sm:$0xff]
    %v481 = vld [vmem:[#allocation6 + $0x1c8] sm:$0xff]
    %v482 = vld [vmem:[#allocation6 + $0x1d0] sm:$0xff]
    %v483 = vld [vmem:[#allocation6 + $0x1d8] sm:$0xff]
    %v484 = vld [vmem:[#allocation6 + $0x1e0] sm:$0xff]
    %v485 = vld [vmem:[#allocation6 + $0x1e8] sm:$0xff]
    %v486 = vld [vmem:[#allocation6 + $0x1f0] sm:$0xff]
    %v487 = vld [vmem:[#allocation6 + $0x1f8] sm:$0xff]
    %v488 = vld [vmem:[#allocation6 + $0x200] sm:$0xff]
    %v489 = vld [vmem:[#allocation6 + $0x208] sm:$0xff]
    %v490 = vld [vmem:[#allocation6 + $0x210] sm:$0xff]
    %v491 = vld [vmem:[#allocation6 + $0x218] sm:$0xff]
    %v492 = vld [vmem:[#allocation6 + $0x220] sm:$0xff]
    %v493 = vld [vmem:[#allocation6 + $0x228] sm:$0xff]
    %v494 = vld [vmem:[#allocation6 + $0x230] sm:$0xff]
    %v495 = vld [vmem:[#allocation6 + $0x238] sm:$0xff]
    %v496 = vld [vmem:[#allocation6 + $0x240] sm:$0xff]
    %v497 = vld [vmem:[#allocation6 + $0x248] sm:$0xff]
    %v498 = vld [vmem:[#allocation6 + $0x250] sm:$0xff]
    %v499 = vld [vmem:[#allocation6 + $0x258] sm:$0xff]
    %v500 = vld [vmem:[#allocation6 + $0x260] sm:$0xff]
    %v501 = vld [vmem:[#allocation6 + $0x268] sm:$0xff]
    %v502 = vld [vmem:[#allocation6 + $0x270] sm:$0xff]
    %v503 = vld [vmem:[#allocation6 + $0x278] sm:$0xff]
    %v504 = vld [vmem:[#allocation6 + $0x280] sm:$0xff]
    %v505 = vld [vmem:[#allocation6 + $0x288] sm:$0xff]
    %v506 = vld [vmem:[#allocation6 + $0x290] sm:$0xff]
    %v507 = vld [vmem:[#allocation6 + $0x298] sm:$0xff]
    %v508 = vld [vmem:[#allocation6 + $0x2a0] sm:$0xff]
    %v509 = vld [vmem:[#allocation6 + $0x2a8] sm:$0xff]
    %v510 = vld [vmem:[#allocation6 + $0x2b0] sm:$0xff]
    %v511 = vld [vmem:[#allocation6 + $0x2b8] sm:$0xff]
    %v512 = vld [vmem:[#allocation6 + $0x2c0] sm:$0xff]
    %v513 = vld [vmem:[#allocation6 + $0x2c8] sm:$0xff]
    %v514 = vld [vmem:[#allocation6 + $0x2d0] sm:$0xff]
    %v515 = vld [vmem:[#allocation6 + $0x2d8] sm:$0xff]
    %v516 = vld [vmem:[#allocation6 + $0x2e0] sm:$0xff]
    %v517 = vld [vmem:[#allocation6 + $0x2e8] sm:$0xff]
    %v518 = vld [vmem:[#allocation6 + $0x2f0] sm:$0xff]
    %v519 = vld [vmem:[#allocation6 + $0x2f8] sm:$0xff]
    %v520 = vld [vmem:[#allocation6 + $0x300] sm:$0xff]
    %v521 = vld [vmem:[#allocation6 + $0x308] sm:$0xff]
    %v522 = vld [vmem:[#allocation6 + $0x310] sm:$0xff]
    %v523 = vld [vmem:[#allocation6 + $0x318] sm:$0xff]
    %v524 = vld [vmem:[#allocation6 + $0x320] sm:$0xff]
    %v525 = vld [vmem:[#allocation6 + $0x328] sm:$0xff]
    %v526 = vld [vmem:[#allocation6 + $0x330] sm:$0xff]
    %v527 = vld [vmem:[#allocation6 + $0x338] sm:$0xff]
    %v528 = vld [vmem:[#allocation6 + $0x340] sm:$0xff]
    %v529 = vld [vmem:[#allocation6 + $0x348] sm:$0xff]
    %v530 = vld [vmem:[#allocation6 + $0x350] sm:$0xff]
    %v531 = vld [vmem:[#allocation6 + $0x358] sm:$0xff]
    %v532 = vld [vmem:[#allocation6 + $0x360] sm:$0xff]
    %v533 = vld [vmem:[#allocation6 + $0x368] sm:$0xff]
    %v534 = vld [vmem:[#allocation6 + $0x370] sm:$0xff]
    %v535 = vld [vmem:[#allocation6 + $0x378] sm:$0xff]
    %v536 = vld [vmem:[#allocation6 + $0x380] sm:$0xff]
    %v537 = vld [vmem:[#allocation6 + $0x388] sm:$0xff]
    %v538 = vld [vmem:[#allocation6 + $0x390] sm:$0xff]
    %v539 = vld [vmem:[#allocation6 + $0x398] sm:$0xff]
    %v540 = vld [vmem:[#allocation6 + $0x3a0] sm:$0xff]
    %v541 = vld [vmem:[#allocation6 + $0x3a8] sm:$0xff]
    %v542 = vld [vmem:[#allocation6 + $0x3b0] sm:$0xff]
    %v543 = vld [vmem:[#allocation6 + $0x3b8] sm:$0xff]
    %v544 = vld [vmem:[#allocation6 + $0x3c0] sm:$0xff]
    %v545 = vld [vmem:[#allocation6 + $0x3c8] sm:$0xff]
    %v546 = vld [vmem:[#allocation6 + $0x3d0] sm:$0xff]
    %v547 = vld [vmem:[#allocation6 + $0x3d8] sm:$0xff]
    %v548 = vld [vmem:[#allocation6 + $0x3e0] sm:$0xff]
    %v549 = vld [vmem:[#allocation6 + $0x3e8] sm:$0xff]
    %v550 = vld [vmem:[#allocation6 + $0x3f0] sm:$0xff]
    %v551 = vld [vmem:[#allocation6 + $0x3f8] sm:$0xff]
    %v552 = vld [vmem:[#allocation6 + $0x400] sm:$0xff]
    %v553 = vld [vmem:[#allocation6 + $0x408] sm:$0xff]
    %v554 = vld [vmem:[#allocation6 + $0x410] sm:$0xff]
    %v555 = vld [vmem:[#allocation6 + $0x418] sm:$0xff]
    %v556 = vld [vmem:[#allocation6 + $0x420] sm:$0xff]
    %v557 = vld [vmem:[#allocation6 + $0x428] sm:$0xff]
    %v558 = vld [vmem:[#allocation6 + $0x430] sm:$0xff]
    %v559 = vld [vmem:[#allocation6 + $0x438] sm:$0xff]
    %v560 = vld [vmem:[#allocation6 + $0x440] sm:$0xff]
    %v561 = vld [vmem:[#allocation6 + $0x448] sm:$0xff]
    %v562 = vld [vmem:[#allocation6 + $0x450] sm:$0xff]
    %v563 = vld [vmem:[#allocation6 + $0x458] sm:$0xff]
    %v564 = vld [vmem:[#allocation6 + $0x460] sm:$0xff]
    %v565 = vld [vmem:[#allocation6 + $0x468] sm:$0xff]
    %v566 = vld [vmem:[#allocation6 + $0x470] sm:$0xff]
    %v567 = vld [vmem:[#allocation6 + $0x478] sm:$0xff]
    %v568 = vld [vmem:[#allocation6 + $0x480] sm:$0xff]
    %v569 = vld [vmem:[#allocation6 + $0x488] sm:$0xff]
    %v570 = vld [vmem:[#allocation6 + $0x490] sm:$0xff]
    %v571 = vld [vmem:[#allocation6 + $0x498] sm:$0xff]
    %v572 = vld [vmem:[#allocation6 + $0x4a0] sm:$0xff]
    %v573 = vld [vmem:[#allocation6 + $0x4a8] sm:$0xff]
    %v574 = vld [vmem:[#allocation6 + $0x4b0] sm:$0xff]
    %v575 = vld [vmem:[#allocation6 + $0x4b8] sm:$0xff]
    %v576 = vld [vmem:[#allocation6 + $0x4c0] sm:$0xff]
    %v577 = vld [vmem:[#allocation6 + $0x4c8] sm:$0xff]
    %v578 = vld [vmem:[#allocation6 + $0x4d0] sm:$0xff]
    %v579 = vld [vmem:[#allocation6 + $0x4d8] sm:$0xff]
    %v580 = vld [vmem:[#allocation6 + $0x4e0] sm:$0xff]
    %v581 = vld [vmem:[#allocation6 + $0x4e8] sm:$0xff]
    %v582 = vld [vmem:[#allocation6 + $0x4f0] sm:$0xff]
    %v583 = vld [vmem:[#allocation6 + $0x4f8] sm:$0xff]
    %v584 = vld [vmem:[#allocation6 + $0x500] sm:$0xff]
    %v585 = vld [vmem:[#allocation6 + $0x508] sm:$0xff]
    %v586 = vld [vmem:[#allocation6 + $0x510] sm:$0xff]
    %v587 = vld [vmem:[#allocation6 + $0x518] sm:$0xff]
    %v588 = vld [vmem:[#allocation6 + $0x520] sm:$0xff]
    %v589 = vld [vmem:[#allocation6 + $0x528] sm:$0xff]
    %v590 = vld [vmem:[#allocation6 + $0x530] sm:$0xff]
    %v591 = vld [vmem:[#allocation6 + $0x538] sm:$0xff]
    %v592 = vld [vmem:[#allocation6 + $0x540] sm:$0xff]
    %v593 = vld [vmem:[#allocation6 + $0x548] sm:$0xff]
    %v594 = vld [vmem:[#allocation6 + $0x550] sm:$0xff]
    %v595 = vld [vmem:[#allocation6 + $0x558] sm:$0xff]
    %v596 = vld [vmem:[#allocation6 + $0x560] sm:$0xff]
    %v597 = vld [vmem:[#allocation6 + $0x568] sm:$0xff]
    %v598 = vld [vmem:[#allocation6 + $0x570] sm:$0xff]
    %v599 = vld [vmem:[#allocation6 + $0x578] sm:$0xff]
    %v600 = vld [vmem:[#allocation6 + $0x580] sm:$0xff]
    %v601 = vld [vmem:[#allocation6 + $0x588] sm:$0xff]
    %v602 = vld [vmem:[#allocation6 + $0x590] sm:$0xff]
    %v603 = vld [vmem:[#allocation6 + $0x598] sm:$0xff]
    %v604 = vld [vmem:[#allocation6 + $0x5a0] sm:$0xff]
    %v605 = vld [vmem:[#allocation6 + $0x5a8] sm:$0xff]
    %v606 = vld [vmem:[#allocation6 + $0x5b0] sm:$0xff]
    %v607 = vld [vmem:[#allocation6 + $0x5b8] sm:$0xff]
    %v608 = vld [vmem:[#allocation6 + $0x5c0] sm:$0xff]
    %v609 = vld [vmem:[#allocation6 + $0x5c8] sm:$0xff]
    %v610 = vld [vmem:[#allocation6 + $0x5d0] sm:$0xff]
    %v611 = vld [vmem:[#allocation6 + $0x5d8] sm:$0xff]
    %v612 = vld [vmem:[#allocation6 + $0x5e0] sm:$0xff]
    %v613 = vld [vmem:[#allocation6 + $0x5e8] sm:$0xff]
    %v614 = vld [vmem:[#allocation6 + $0x5f0] sm:$0xff]
    %v615 = vld [vmem:[#allocation6 + $0x5f8] sm:$0xff]
    %v616 = vld [vmem:[#allocation6 + $0x600] sm:$0xff]
    %v617 = vld [vmem:[#allocation6 + $0x608] sm:$0xff]
    %v618 = vld [vmem:[#allocation6 + $0x610] sm:$0xff]
    %v619 = vld [vmem:[#allocation6 + $0x618] sm:$0xff]
    %v620 = vld [vmem:[#allocation6 + $0x620] sm:$0xff]
    %v621 = vld [vmem:[#allocation6 + $0x628] sm:$0xff]
    %v622 = vld [vmem:[#allocation6 + $0x630] sm:$0xff]
    %v623 = vld [vmem:[#allocation6 + $0x638] sm:$0xff]
    %v624 = vld [vmem:[#allocation6 + $0x640] sm:$0xff]
    %v625 = vld [vmem:[#allocation6 + $0x648] sm:$0xff]
    %v626 = vld [vmem:[#allocation6 + $0x650] sm:$0xff]
    %v627 = vld [vmem:[#allocation6 + $0x658] sm:$0xff]
    %v628 = vld [vmem:[#allocation6 + $0x660] sm:$0xff]
    %v629 = vld [vmem:[#allocation6 + $0x668] sm:$0xff]
    %v630 = vld [vmem:[#allocation6 + $0x670] sm:$0xff]
    %v631 = vld [vmem:[#allocation6 + $0x678] sm:$0xff]
    %v632 = vld [vmem:[#allocation6 + $0x680] sm:$0xff]
    %v633 = vld [vmem:[#allocation6 + $0x688] sm:$0xff]
    %v634 = vld [vmem:[#allocation6 + $0x690] sm:$0xff]
    %v635 = vld [vmem:[#allocation6 + $0x698] sm:$0xff]
    %v636 = vld [vmem:[#allocation6 + $0x6a0] sm:$0xff]
    %v637 = vld [vmem:[#allocation6 + $0x6a8] sm:$0xff]
    %v638 = vld [vmem:[#allocation6 + $0x6b0] sm:$0xff]
    %v639 = vld [vmem:[#allocation6 + $0x6b8] sm:$0xff]
    %v640 = vld [vmem:[#allocation6 + $0x6c0] sm:$0xff]
    %v641 = vld [vmem:[#allocation6 + $0x6c8] sm:$0xff]
    %v642 = vld [vmem:[#allocation6 + $0x6d0] sm:$0xff]
    %v643 = vld [vmem:[#allocation6 + $0x6d8] sm:$0xff]
    %v644 = vld [vmem:[#allocation6 + $0x6e0] sm:$0xff]
    %v645 = vld [vmem:[#allocation6 + $0x6e8] sm:$0xff]
    %v646 = vld [vmem:[#allocation6 + $0x6f0] sm:$0xff]
    %v647 = vld [vmem:[#allocation6 + $0x6f8] sm:$0xff]
    %v648 = vld [vmem:[#allocation6 + $0x700] sm:$0xff]
    %v649 = vld [vmem:[#allocation6 + $0x708] sm:$0xff]
    %v650 = vld [vmem:[#allocation6 + $0x710] sm:$0xff]
    %v651 = vld [vmem:[#allocation6 + $0x718] sm:$0xff]
    %v652 = vld [vmem:[#allocation6 + $0x720] sm:$0xff]
    %v653 = vld [vmem:[#allocation6 + $0x728] sm:$0xff]
    %v654 = vld [vmem:[#allocation6 + $0x730] sm:$0xff]
    %v655 = vld [vmem:[#allocation6 + $0x738] sm:$0xff]
    %v656 = vld [vmem:[#allocation6 + $0x740] sm:$0xff]
    %v657 = vld [vmem:[#allocation6 + $0x748] sm:$0xff]
    %v658 = vld [vmem:[#allocation6 + $0x750] sm:$0xff]
    %v659 = vld [vmem:[#allocation6 + $0x758] sm:$0xff]
    %v660 = vld [vmem:[#allocation6 + $0x760] sm:$0xff]
    %v661 = vld [vmem:[#allocation6 + $0x768] sm:$0xff]
    %v662 = vld [vmem:[#allocation6 + $0x770] sm:$0xff]
    %v663 = vld [vmem:[#allocation6 + $0x778] sm:$0xff]
    %v664 = vld [vmem:[#allocation6 + $0x780] sm:$0xff]
    %v665 = vld [vmem:[#allocation6 + $0x788] sm:$0xff]
    %v666 = vld [vmem:[#allocation6 + $0x790] sm:$0xff]
    %v667 = vld [vmem:[#allocation6 + $0x798] sm:$0xff]
    %v668 = vld [vmem:[#allocation6 + $0x7a0] sm:$0xff]
    %v669 = vld [vmem:[#allocation6 + $0x7a8] sm:$0xff]
    %v670 = vld [vmem:[#allocation6 + $0x7b0] sm:$0xff]
    %v671 = vld [vmem:[#allocation6 + $0x7b8] sm:$0xff]
    %v672 = vld [vmem:[#allocation6 + $0x7c0] sm:$0xff]
    %v673 = vld [vmem:[#allocation6 + $0x7c8] sm:$0xff]
    %v674 = vld [vmem:[#allocation6 + $0x7d0] sm:$0xff]
    %v675 = vld [vmem:[#allocation6 + $0x7d8] sm:$0xff]
    %v676 = vld [vmem:[#allocation6 + $0x7e0] sm:$0xff]
    %v677 = vld [vmem:[#allocation6 + $0x7e8] sm:$0xff]
    %v678 = vld [vmem:[#allocation6 + $0x7f0] sm:$0xff]
    %v679 = vld [vmem:[#allocation6 + $0x7f8] sm:$0xff]
    %v680 = vld [vmem:[%s4] sm:$0xf]
    %v682 = vlaneseq
    %v683 = vshrl.u32 %v682, 7
    %v684 = vsub.s32 0, %v683
    %v685 = vrot.slane %v680, %v684
    %v686 = vlaneseq
    %v687 = vshrl.u32 %v686, 7
    %v688 = vsub.s32 1, %v687
    %v689 = vrot.slane %v680, %v688
    %v690 = vlaneseq
    %v691 = vshrl.u32 %v690, 7
    %v692 = vsub.s32 2, %v691
    %v693 = vrot.slane %v680, %v692
    %v694 = vlaneseq
    %v695 = vshrl.u32 %v694, 7
    %v696 = vsub.s32 3, %v695
    %v697 = vrot.slane %v680, %v696
    %v958 = vunpack.c.l.b16 %v424
    %v959 = vunpack.c.h.b16 %v424
    %v960 = vunpack.c.l.b16 %v425
    %v961 = vunpack.c.h.b16 %v425
    %v962 = vunpack.c.l.b16 %v426
    %v963 = vunpack.c.h.b16 %v426
    %v964 = vunpack.c.l.b16 %v427
    %v965 = vunpack.c.h.b16 %v427
    %v966 = vunpack.c.l.b16 %v428
    %v967 = vunpack.c.h.b16 %v428
    %v968 = vunpack.c.l.b16 %v429
    %v969 = vunpack.c.h.b16 %v429
    %v970 = vunpack.c.l.b16 %v430
    %v971 = vunpack.c.h.b16 %v430
    %v972 = vunpack.c.l.b16 %v431
    %v973 = vunpack.c.h.b16 %v431
    %v974 = vunpack.c.l.b16 %v432
    %v975 = vunpack.c.h.b16 %v432
    %v976 = vunpack.c.l.b16 %v433
    %v977 = vunpack.c.h.b16 %v433
    %v978 = vunpack.c.l.b16 %v434
    %v979 = vunpack.c.h.b16 %v434
    %v980 = vunpack.c.l.b16 %v435
    %v981 = vunpack.c.h.b16 %v435
    %v982 = vunpack.c.l.b16 %v436
    %v983 = vunpack.c.h.b16 %v436
    %v984 = vunpack.c.l.b16 %v437
    %v985 = vunpack.c.h.b16 %v437
    %v986 = vunpack.c.l.b16 %v438
    %v987 = vunpack.c.h.b16 %v438
    %v988 = vunpack.c.l.b16 %v439
    %v989 = vunpack.c.h.b16 %v439
    %v990 = vunpack.c.l.b16 %v440
    %v991 = vunpack.c.h.b16 %v440
    %v992 = vunpack.c.l.b16 %v441
    %v993 = vunpack.c.h.b16 %v441
    %v994 = vunpack.c.l.b16 %v442
    %v995 = vunpack.c.h.b16 %v442
    %v996 = vunpack.c.l.b16 %v443
    %v997 = vunpack.c.h.b16 %v443
    %v998 = vunpack.c.l.b16 %v444
    %v999 = vunpack.c.h.b16 %v444
    %v1000 = vunpack.c.l.b16 %v445
    %v1001 = vunpack.c.h.b16 %v445
    %v1002 = vunpack.c.l.b16 %v446
    %v1003 = vunpack.c.h.b16 %v446
    %v1004 = vunpack.c.l.b16 %v447
    %v1005 = vunpack.c.h.b16 %v447
    %v1006 = vunpack.c.l.b16 %v448
    %v1007 = vunpack.c.h.b16 %v448
    %v1008 = vunpack.c.l.b16 %v449
    %v1009 = vunpack.c.h.b16 %v449
    %v1010 = vunpack.c.l.b16 %v450
    %v1011 = vunpack.c.h.b16 %v450
    %v1012 = vunpack.c.l.b16 %v451
    %v1013 = vunpack.c.h.b16 %v451
    %v1014 = vunpack.c.l.b16 %v452
    %v1015 = vunpack.c.h.b16 %v452
    %v1016 = vunpack.c.l.b16 %v453
    %v1017 = vunpack.c.h.b16 %v453
    %v1018 = vunpack.c.l.b16 %v454
    %v1019 = vunpack.c.h.b16 %v454
    %v1020 = vunpack.c.l.b16 %v455
    %v1021 = vunpack.c.h.b16 %v455
    %v1022 = vunpack.c.l.b16 %v456
    %v1023 = vunpack.c.h.b16 %v456
    %v1024 = vunpack.c.l.b16 %v457
    %v1025 = vunpack.c.h.b16 %v457
    %v1026 = vunpack.c.l.b16 %v458
    %v1027 = vunpack.c.h.b16 %v458
    %v1028 = vunpack.c.l.b16 %v459
    %v1029 = vunpack.c.h.b16 %v459
    %v1030 = vunpack.c.l.b16 %v460
    %v1031 = vunpack.c.h.b16 %v460
    %v1032 = vunpack.c.l.b16 %v461
    %v1033 = vunpack.c.h.b16 %v461
    %v1034 = vunpack.c.l.b16 %v462
    %v1035 = vunpack.c.h.b16 %v462
    %v1036 = vunpack.c.l.b16 %v463
    %v1037 = vunpack.c.h.b16 %v463
    %v1038 = vunpack.c.l.b16 %v464
    %v1039 = vunpack.c.h.b16 %v464
    %v1040 = vunpack.c.l.b16 %v465
    %v1041 = vunpack.c.h.b16 %v465
    %v1042 = vunpack.c.l.b16 %v466
    %v1043 = vunpack.c.h.b16 %v466
    %v1044 = vunpack.c.l.b16 %v467
    %v1045 = vunpack.c.h.b16 %v467
    %v1046 = vunpack.c.l.b16 %v468
    %v1047 = vunpack.c.h.b16 %v468
    %v1048 = vunpack.c.l.b16 %v469
    %v1049 = vunpack.c.h.b16 %v469
    %v1050 = vunpack.c.l.b16 %v470
    %v1051 = vunpack.c.h.b16 %v470
    %v1052 = vunpack.c.l.b16 %v471
    %v1053 = vunpack.c.h.b16 %v471
    %v1054 = vunpack.c.l.b16 %v472
    %v1055 = vunpack.c.h.b16 %v472
    %v1056 = vunpack.c.l.b16 %v473
    %v1057 = vunpack.c.h.b16 %v473
    %v1058 = vunpack.c.l.b16 %v474
    %v1059 = vunpack.c.h.b16 %v474
    %v1060 = vunpack.c.l.b16 %v475
    %v1061 = vunpack.c.h.b16 %v475
    %v1062 = vunpack.c.l.b16 %v476
    %v1063 = vunpack.c.h.b16 %v476
    %v1064 = vunpack.c.l.b16 %v477
    %v1065 = vunpack.c.h.b16 %v477
    %v1066 = vunpack.c.l.b16 %v478
    %v1067 = vunpack.c.h.b16 %v478
    %v1068 = vunpack.c.l.b16 %v479
    %v1069 = vunpack.c.h.b16 %v479
    %v1070 = vunpack.c.l.b16 %v480
    %v1071 = vunpack.c.h.b16 %v480
    %v1072 = vunpack.c.l.b16 %v481
    %v1073 = vunpack.c.h.b16 %v481
    %v1074 = vunpack.c.l.b16 %v482
    %v1075 = vunpack.c.h.b16 %v482
    %v1076 = vunpack.c.l.b16 %v483
    %v1077 = vunpack.c.h.b16 %v483
    %v1078 = vunpack.c.l.b16 %v484
    %v1079 = vunpack.c.h.b16 %v484
    %v1080 = vunpack.c.l.b16 %v485
    %v1081 = vunpack.c.h.b16 %v485
    %v1082 = vunpack.c.l.b16 %v486
    %v1083 = vunpack.c.h.b16 %v486
    %v1084 = vunpack.c.l.b16 %v487
    %v1085 = vunpack.c.h.b16 %v487
    %v1086 = vunpack.c.l.b16 %v488
    %v1087 = vunpack.c.h.b16 %v488
    %v1088 = vunpack.c.l.b16 %v489
    %v1089 = vunpack.c.h.b16 %v489
    %v1090 = vunpack.c.l.b16 %v490
    %v1091 = vunpack.c.h.b16 %v490
    %v1092 = vunpack.c.l.b16 %v491
    %v1093 = vunpack.c.h.b16 %v491
    %v1094 = vunpack.c.l.b16 %v492
    %v1095 = vunpack.c.h.b16 %v492
    %v1096 = vunpack.c.l.b16 %v493
    %v1097 = vunpack.c.h.b16 %v493
    %v1098 = vunpack.c.l.b16 %v494
    %v1099 = vunpack.c.h.b16 %v494
    %v1100 = vunpack.c.l.b16 %v495
    %v1101 = vunpack.c.h.b16 %v495
    %v1102 = vunpack.c.l.b16 %v496
    %v1103 = vunpack.c.h.b16 %v496
    %v1104 = vunpack.c.l.b16 %v497
    %v1105 = vunpack.c.h.b16 %v497
    %v1106 = vunpack.c.l.b16 %v498
    %v1107 = vunpack.c.h.b16 %v498
    %v1108 = vunpack.c.l.b16 %v499
    %v1109 = vunpack.c.h.b16 %v499
    %v1110 = vunpack.c.l.b16 %v500
    %v1111 = vunpack.c.h.b16 %v500
    %v1112 = vunpack.c.l.b16 %v501
    %v1113 = vunpack.c.h.b16 %v501
    %v1114 = vunpack.c.l.b16 %v502
    %v1115 = vunpack.c.h.b16 %v502
    %v1116 = vunpack.c.l.b16 %v503
    %v1117 = vunpack.c.h.b16 %v503
    %v1118 = vunpack.c.l.b16 %v504
    %v1119 = vunpack.c.h.b16 %v504
    %v1120 = vunpack.c.l.b16 %v505
    %v1121 = vunpack.c.h.b16 %v505
    %v1122 = vunpack.c.l.b16 %v506
    %v1123 = vunpack.c.h.b16 %v506
    %v1124 = vunpack.c.l.b16 %v507
    %v1125 = vunpack.c.h.b16 %v507
    %v1126 = vunpack.c.l.b16 %v508
    %v1127 = vunpack.c.h.b16 %v508
    %v1128 = vunpack.c.l.b16 %v509
    %v1129 = vunpack.c.h.b16 %v509
    %v1130 = vunpack.c.l.b16 %v510
    %v1131 = vunpack.c.h.b16 %v510
    %v1132 = vunpack.c.l.b16 %v511
    %v1133 = vunpack.c.h.b16 %v511
    %v1134 = vunpack.c.l.b16 %v512
    %v1135 = vunpack.c.h.b16 %v512
    %v1136 = vunpack.c.l.b16 %v513
    %v1137 = vunpack.c.h.b16 %v513
    %v1138 = vunpack.c.l.b16 %v514
    %v1139 = vunpack.c.h.b16 %v514
    %v1140 = vunpack.c.l.b16 %v515
    %v1141 = vunpack.c.h.b16 %v515
    %v1142 = vunpack.c.l.b16 %v516
    %v1143 = vunpack.c.h.b16 %v516
    %v1144 = vunpack.c.l.b16 %v517
    %v1145 = vunpack.c.h.b16 %v517
    %v1146 = vunpack.c.l.b16 %v518
    %v1147 = vunpack.c.h.b16 %v518
    %v1148 = vunpack.c.l.b16 %v519
    %v1149 = vunpack.c.h.b16 %v519
    %v1150 = vunpack.c.l.b16 %v520
    %v1151 = vunpack.c.h.b16 %v520
    %v1152 = vunpack.c.l.b16 %v521
    %v1153 = vunpack.c.h.b16 %v521
    %v1154 = vunpack.c.l.b16 %v522
    %v1155 = vunpack.c.h.b16 %v522
    %v1156 = vunpack.c.l.b16 %v523
    %v1157 = vunpack.c.h.b16 %v523
    %v1158 = vunpack.c.l.b16 %v524
    %v1159 = vunpack.c.h.b16 %v524
    %v1160 = vunpack.c.l.b16 %v525
    %v1161 = vunpack.c.h.b16 %v525
    %v1162 = vunpack.c.l.b16 %v526
    %v1163 = vunpack.c.h.b16 %v526
    %v1164 = vunpack.c.l.b16 %v527
    %v1165 = vunpack.c.h.b16 %v527
    %v1166 = vunpack.c.l.b16 %v528
    %v1167 = vunpack.c.h.b16 %v528
    %v1168 = vunpack.c.l.b16 %v529
    %v1169 = vunpack.c.h.b16 %v529
    %v1170 = vunpack.c.l.b16 %v530
    %v1171 = vunpack.c.h.b16 %v530
    %v1172 = vunpack.c.l.b16 %v531
    %v1173 = vunpack.c.h.b16 %v531
    %v1174 = vunpack.c.l.b16 %v532
    %v1175 = vunpack.c.h.b16 %v532
    %v1176 = vunpack.c.l.b16 %v533
    %v1177 = vunpack.c.h.b16 %v533
    %v1178 = vunpack.c.l.b16 %v534
    %v1179 = vunpack.c.h.b16 %v534
    %v1180 = vunpack.c.l.b16 %v535
    %v1181 = vunpack.c.h.b16 %v535
    %v1182 = vunpack.c.l.b16 %v536
    %v1183 = vunpack.c.h.b16 %v536
    %v1184 = vunpack.c.l.b16 %v537
    %v1185 = vunpack.c.h.b16 %v537
    %v1186 = vunpack.c.l.b16 %v538
    %v1187 = vunpack.c.h.b16 %v538
    %v1188 = vunpack.c.l.b16 %v539
    %v1189 = vunpack.c.h.b16 %v539
    %v1190 = vunpack.c.l.b16 %v540
    %v1191 = vunpack.c.h.b16 %v540
    %v1192 = vunpack.c.l.b16 %v541
    %v1193 = vunpack.c.h.b16 %v541
    %v1194 = vunpack.c.l.b16 %v542
    %v1195 = vunpack.c.h.b16 %v542
    %v1196 = vunpack.c.l.b16 %v543
    %v1197 = vunpack.c.h.b16 %v543
    %v1198 = vunpack.c.l.b16 %v544
    %v1199 = vunpack.c.h.b16 %v544
    %v1200 = vunpack.c.l.b16 %v545
    %v1201 = vunpack.c.h.b16 %v545
    %v1202 = vunpack.c.l.b16 %v546
    %v1203 = vunpack.c.h.b16 %v546
    %v1204 = vunpack.c.l.b16 %v547
    %v1205 = vunpack.c.h.b16 %v547
    %v1206 = vunpack.c.l.b16 %v548
    %v1207 = vunpack.c.h.b16 %v548
    %v1208 = vunpack.c.l.b16 %v549
    %v1209 = vunpack.c.h.b16 %v549
    %v1210 = vunpack.c.l.b16 %v550
    %v1211 = vunpack.c.h.b16 %v550
    %v1212 = vunpack.c.l.b16 %v551
    %v1213 = vunpack.c.h.b16 %v551
    %v1214 = vunpack.c.l.b16 %v552
    %v1215 = vunpack.c.h.b16 %v552
    %v1216 = vunpack.c.l.b16 %v553
    %v1217 = vunpack.c.h.b16 %v553
    %v1218 = vunpack.c.l.b16 %v554
    %v1219 = vunpack.c.h.b16 %v554
    %v1220 = vunpack.c.l.b16 %v555
    %v1221 = vunpack.c.h.b16 %v555
    %v1222 = vunpack.c.l.b16 %v556
    %v1223 = vunpack.c.h.b16 %v556
    %v1224 = vunpack.c.l.b16 %v557
    %v1225 = vunpack.c.h.b16 %v557
    %v1226 = vunpack.c.l.b16 %v558
    %v1227 = vunpack.c.h.b16 %v558
    %v1228 = vunpack.c.l.b16 %v559
    %v1229 = vunpack.c.h.b16 %v559
    %v1230 = vunpack.c.l.b16 %v560
    %v1231 = vunpack.c.h.b16 %v560
    %v1232 = vunpack.c.l.b16 %v561
    %v1233 = vunpack.c.h.b16 %v561
    %v1234 = vunpack.c.l.b16 %v562
    %v1235 = vunpack.c.h.b16 %v562
    %v1236 = vunpack.c.l.b16 %v563
    %v1237 = vunpack.c.h.b16 %v563
    %v1238 = vunpack.c.l.b16 %v564
    %v1239 = vunpack.c.h.b16 %v564
    %v1240 = vunpack.c.l.b16 %v565
    %v1241 = vunpack.c.h.b16 %v565
    %v1242 = vunpack.c.l.b16 %v566
    %v1243 = vunpack.c.h.b16 %v566
    %v1244 = vunpack.c.l.b16 %v567
    %v1245 = vunpack.c.h.b16 %v567
    %v1246 = vunpack.c.l.b16 %v568
    %v1247 = vunpack.c.h.b16 %v568
    %v1248 = vunpack.c.l.b16 %v569
    %v1249 = vunpack.c.h.b16 %v569
    %v1250 = vunpack.c.l.b16 %v570
    %v1251 = vunpack.c.h.b16 %v570
    %v1252 = vunpack.c.l.b16 %v571
    %v1253 = vunpack.c.h.b16 %v571
    %v1254 = vunpack.c.l.b16 %v572
    %v1255 = vunpack.c.h.b16 %v572
    %v1256 = vunpack.c.l.b16 %v573
    %v1257 = vunpack.c.h.b16 %v573
    %v1258 = vunpack.c.l.b16 %v574
    %v1259 = vunpack.c.h.b16 %v574
    %v1260 = vunpack.c.l.b16 %v575
    %v1261 = vunpack.c.h.b16 %v575
    %v1262 = vunpack.c.l.b16 %v576
    %v1263 = vunpack.c.h.b16 %v576
    %v1264 = vunpack.c.l.b16 %v577
    %v1265 = vunpack.c.h.b16 %v577
    %v1266 = vunpack.c.l.b16 %v578
    %v1267 = vunpack.c.h.b16 %v578
    %v1268 = vunpack.c.l.b16 %v579
    %v1269 = vunpack.c.h.b16 %v579
    %v1270 = vunpack.c.l.b16 %v580
    %v1271 = vunpack.c.h.b16 %v580
    %v1272 = vunpack.c.l.b16 %v581
    %v1273 = vunpack.c.h.b16 %v581
    %v1274 = vunpack.c.l.b16 %v582
    %v1275 = vunpack.c.h.b16 %v582
    %v1276 = vunpack.c.l.b16 %v583
    %v1277 = vunpack.c.h.b16 %v583
    %v1278 = vunpack.c.l.b16 %v584
    %v1279 = vunpack.c.h.b16 %v584
    %v1280 = vunpack.c.l.b16 %v585
    %v1281 = vunpack.c.h.b16 %v585
    %v1282 = vunpack.c.l.b16 %v586
    %v1283 = vunpack.c.h.b16 %v586
    %v1284 = vunpack.c.l.b16 %v587
    %v1285 = vunpack.c.h.b16 %v587
    %v1286 = vunpack.c.l.b16 %v588
    %v1287 = vunpack.c.h.b16 %v588
    %v1288 = vunpack.c.l.b16 %v589
    %v1289 = vunpack.c.h.b16 %v589
    %v1290 = vunpack.c.l.b16 %v590
    %v1291 = vunpack.c.h.b16 %v590
    %v1292 = vunpack.c.l.b16 %v591
    %v1293 = vunpack.c.h.b16 %v591
    %v1294 = vunpack.c.l.b16 %v592
    %v1295 = vunpack.c.h.b16 %v592
    %v1296 = vunpack.c.l.b16 %v593
    %v1297 = vunpack.c.h.b16 %v593
    %v1298 = vunpack.c.l.b16 %v594
    %v1299 = vunpack.c.h.b16 %v594
    %v1300 = vunpack.c.l.b16 %v595
    %v1301 = vunpack.c.h.b16 %v595
    %v1302 = vunpack.c.l.b16 %v596
    %v1303 = vunpack.c.h.b16 %v596
    %v1304 = vunpack.c.l.b16 %v597
    %v1305 = vunpack.c.h.b16 %v597
    %v1306 = vunpack.c.l.b16 %v598
    %v1307 = vunpack.c.h.b16 %v598
    %v1308 = vunpack.c.l.b16 %v599
    %v1309 = vunpack.c.h.b16 %v599
    %v1310 = vunpack.c.l.b16 %v600
    %v1311 = vunpack.c.h.b16 %v600
    %v1312 = vunpack.c.l.b16 %v601
    %v1313 = vunpack.c.h.b16 %v601
    %v1314 = vunpack.c.l.b16 %v602
    %v1315 = vunpack.c.h.b16 %v602
    %v1316 = vunpack.c.l.b16 %v603
    %v1317 = vunpack.c.h.b16 %v603
    %v1318 = vunpack.c.l.b16 %v604
    %v1319 = vunpack.c.h.b16 %v604
    %v1320 = vunpack.c.l.b16 %v605
    %v1321 = vunpack.c.h.b16 %v605
    %v1322 = vunpack.c.l.b16 %v606
    %v1323 = vunpack.c.h.b16 %v606
    %v1324 = vunpack.c.l.b16 %v607
    %v1325 = vunpack.c.h.b16 %v607
    %v1326 = vunpack.c.l.b16 %v608
    %v1327 = vunpack.c.h.b16 %v608
    %v1328 = vunpack.c.l.b16 %v609
    %v1329 = vunpack.c.h.b16 %v609
    %v1330 = vunpack.c.l.b16 %v610
    %v1331 = vunpack.c.h.b16 %v610
    %v1332 = vunpack.c.l.b16 %v611
    %v1333 = vunpack.c.h.b16 %v611
    %v1334 = vunpack.c.l.b16 %v612
    %v1335 = vunpack.c.h.b16 %v612
    %v1336 = vunpack.c.l.b16 %v613
    %v1337 = vunpack.c.h.b16 %v613
    %v1338 = vunpack.c.l.b16 %v614
    %v1339 = vunpack.c.h.b16 %v614
    %v1340 = vunpack.c.l.b16 %v615
    %v1341 = vunpack.c.h.b16 %v615
    %v1342 = vunpack.c.l.b16 %v616
    %v1343 = vunpack.c.h.b16 %v616
    %v1344 = vunpack.c.l.b16 %v617
    %v1345 = vunpack.c.h.b16 %v617
    %v1346 = vunpack.c.l.b16 %v618
    %v1347 = vunpack.c.h.b16 %v618
    %v1348 = vunpack.c.l.b16 %v619
    %v1349 = vunpack.c.h.b16 %v619
    %v1350 = vunpack.c.l.b16 %v620
    %v1351 = vunpack.c.h.b16 %v620
    %v1352 = vunpack.c.l.b16 %v621
    %v1353 = vunpack.c.h.b16 %v621
    %v1354 = vunpack.c.l.b16 %v622
    %v1355 = vunpack.c.h.b16 %v622
    %v1356 = vunpack.c.l.b16 %v623
    %v1357 = vunpack.c.h.b16 %v623
    %v1358 = vunpack.c.l.b16 %v624
    %v1359 = vunpack.c.h.b16 %v624
    %v1360 = vunpack.c.l.b16 %v625
    %v1361 = vunpack.c.h.b16 %v625
    %v1362 = vunpack.c.l.b16 %v626
    %v1363 = vunpack.c.h.b16 %v626
    %v1364 = vunpack.c.l.b16 %v627
    %v1365 = vunpack.c.h.b16 %v627
    %v1366 = vunpack.c.l.b16 %v628
    %v1367 = vunpack.c.h.b16 %v628
    %v1368 = vunpack.c.l.b16 %v629
    %v1369 = vunpack.c.h.b16 %v629
    %v1370 = vunpack.c.l.b16 %v630
    %v1371 = vunpack.c.h.b16 %v630
    %v1372 = vunpack.c.l.b16 %v631
    %v1373 = vunpack.c.h.b16 %v631
    %v1374 = vunpack.c.l.b16 %v632
    %v1375 = vunpack.c.h.b16 %v632
    %v1376 = vunpack.c.l.b16 %v633
    %v1377 = vunpack.c.h.b16 %v633
    %v1378 = vunpack.c.l.b16 %v634
    %v1379 = vunpack.c.h.b16 %v634
    %v1380 = vunpack.c.l.b16 %v635
    %v1381 = vunpack.c.h.b16 %v635
    %v1382 = vunpack.c.l.b16 %v636
    %v1383 = vunpack.c.h.b16 %v636
    %v1384 = vunpack.c.l.b16 %v637
    %v1385 = vunpack.c.h.b16 %v637
    %v1386 = vunpack.c.l.b16 %v638
    %v1387 = vunpack.c.h.b16 %v638
    %v1388 = vunpack.c.l.b16 %v639
    %v1389 = vunpack.c.h.b16 %v639
    %v1390 = vunpack.c.l.b16 %v640
    %v1391 = vunpack.c.h.b16 %v640
    %v1392 = vunpack.c.l.b16 %v641
    %v1393 = vunpack.c.h.b16 %v641
    %v1394 = vunpack.c.l.b16 %v642
    %v1395 = vunpack.c.h.b16 %v642
    %v1396 = vunpack.c.l.b16 %v643
    %v1397 = vunpack.c.h.b16 %v643
    %v1398 = vunpack.c.l.b16 %v644
    %v1399 = vunpack.c.h.b16 %v644
    %v1400 = vunpack.c.l.b16 %v645
    %v1401 = vunpack.c.h.b16 %v645
    %v1402 = vunpack.c.l.b16 %v646
    %v1403 = vunpack.c.h.b16 %v646
    %v1404 = vunpack.c.l.b16 %v647
    %v1405 = vunpack.c.h.b16 %v647
    %v1406 = vunpack.c.l.b16 %v648
    %v1407 = vunpack.c.h.b16 %v648
    %v1408 = vunpack.c.l.b16 %v649
    %v1409 = vunpack.c.h.b16 %v649
    %v1410 = vunpack.c.l.b16 %v650
    %v1411 = vunpack.c.h.b16 %v650
    %v1412 = vunpack.c.l.b16 %v651
    %v1413 = vunpack.c.h.b16 %v651
    %v1414 = vunpack.c.l.b16 %v652
    %v1415 = vunpack.c.h.b16 %v652
    %v1416 = vunpack.c.l.b16 %v653
    %v1417 = vunpack.c.h.b16 %v653
    %v1418 = vunpack.c.l.b16 %v654
    %v1419 = vunpack.c.h.b16 %v654
    %v1420 = vunpack.c.l.b16 %v655
    %v1421 = vunpack.c.h.b16 %v655
    %v1422 = vunpack.c.l.b16 %v656
    %v1423 = vunpack.c.h.b16 %v656
    %v1424 = vunpack.c.l.b16 %v657
    %v1425 = vunpack.c.h.b16 %v657
    %v1426 = vunpack.c.l.b16 %v658
    %v1427 = vunpack.c.h.b16 %v658
    %v1428 = vunpack.c.l.b16 %v659
    %v1429 = vunpack.c.h.b16 %v659
    %v1430 = vunpack.c.l.b16 %v660
    %v1431 = vunpack.c.h.b16 %v660
    %v1432 = vunpack.c.l.b16 %v661
    %v1433 = vunpack.c.h.b16 %v661
    %v1434 = vunpack.c.l.b16 %v662
    %v1435 = vunpack.c.h.b16 %v662
    %v1436 = vunpack.c.l.b16 %v663
    %v1437 = vunpack.c.h.b16 %v663
    %v1438 = vunpack.c.l.b16 %v664
    %v1439 = vunpack.c.h.b16 %v664
    %v1440 = vunpack.c.l.b16 %v665
    %v1441 = vunpack.c.h.b16 %v665
    %v1442 = vunpack.c.l.b16 %v666
    %v1443 = vunpack.c.h.b16 %v666
    %v1444 = vunpack.c.l.b16 %v667
    %v1445 = vunpack.c.h.b16 %v667
    %v1446 = vunpack.c.l.b16 %v668
    %v1447 = vunpack.c.h.b16 %v668
    %v1448 = vunpack.c.l.b16 %v669
    %v1449 = vunpack.c.h.b16 %v669
    %v1450 = vunpack.c.l.b16 %v670
    %v1451 = vunpack.c.h.b16 %v670
    %v1452 = vunpack.c.l.b16 %v671
    %v1453 = vunpack.c.h.b16 %v671
    %v1454 = vunpack.c.l.b16 %v672
    %v1455 = vunpack.c.h.b16 %v672
    %v1456 = vunpack.c.l.b16 %v673
    %v1457 = vunpack.c.h.b16 %v673
    %v1458 = vunpack.c.l.b16 %v674
    %v1459 = vunpack.c.h.b16 %v674
    %v1460 = vunpack.c.l.b16 %v675
    %v1461 = vunpack.c.h.b16 %v675
    %v1462 = vunpack.c.l.b16 %v676
    %v1463 = vunpack.c.h.b16 %v676
    %v1464 = vunpack.c.l.b16 %v677
    %v1465 = vunpack.c.h.b16 %v677
    %v1466 = vunpack.c.l.b16 %v678
    %v1467 = vunpack.c.h.b16 %v678
    %v1468 = vunpack.c.l.b16 %v679
    %v1469 = vunpack.c.h.b16 %v679
    %v1470 = vpack.c.b16 %v962, %v958
    %v1471 = vpack.c.b16 %v963, %v959
    %v1472 = vpack.c.b16 %v964, %v960
    %v1473 = vpack.c.b16 %v965, %v961
    %v1474 = vpack.c.b16 %v970, %v966
    %v1475 = vpack.c.b16 %v971, %v967
    %v1476 = vpack.c.b16 %v972, %v968
    %v1477 = vpack.c.b16 %v973, %v969
    %v1478 = vpack.c.b16 %v978, %v974
    %v1479 = vpack.c.b16 %v979, %v975
    %v1480 = vpack.c.b16 %v980, %v976
    %v1481 = vpack.c.b16 %v981, %v977
    %v1482 = vpack.c.b16 %v986, %v982
    %v1483 = vpack.c.b16 %v987, %v983
    %v1484 = vpack.c.b16 %v988, %v984
    %v1485 = vpack.c.b16 %v989, %v985
    %v1486 = vpack.c.b16 %v994, %v990
    %v1487 = vpack.c.b16 %v995, %v991
    %v1488 = vpack.c.b16 %v996, %v992
    %v1489 = vpack.c.b16 %v997, %v993
    %v1490 = vpack.c.b16 %v1002, %v998
    %v1491 = vpack.c.b16 %v1003, %v999
    %v1492 = vpack.c.b16 %v1004, %v1000
    %v1493 = vpack.c.b16 %v1005, %v1001
    %v1494 = vpack.c.b16 %v1010, %v1006
    %v1495 = vpack.c.b16 %v1011, %v1007
    %v1496 = vpack.c.b16 %v1012, %v1008
    %v1497 = vpack.c.b16 %v1013, %v1009
    %v1498 = vpack.c.b16 %v1018, %v1014
    %v1499 = vpack.c.b16 %v1019, %v1015
    %v1500 = vpack.c.b16 %v1020, %v1016
    %v1501 = vpack.c.b16 %v1021, %v1017
    %v1502 = vpack.c.b16 %v1026, %v1022
    %v1503 = vpack.c.b16 %v1027, %v1023
    %v1504 = vpack.c.b16 %v1028, %v1024
    %v1505 = vpack.c.b16 %v1029, %v1025
    %v1506 = vpack.c.b16 %v1034, %v1030
    %v1507 = vpack.c.b16 %v1035, %v1031
    %v1508 = vpack.c.b16 %v1036, %v1032
    %v1509 = vpack.c.b16 %v1037, %v1033
    %v1510 = vpack.c.b16 %v1042, %v1038
    %v1511 = vpack.c.b16 %v1043, %v1039
    %v1512 = vpack.c.b16 %v1044, %v1040
    %v1513 = vpack.c.b16 %v1045, %v1041
    %v1514 = vpack.c.b16 %v1050, %v1046
    %v1515 = vpack.c.b16 %v1051, %v1047
    %v1516 = vpack.c.b16 %v1052, %v1048
    %v1517 = vpack.c.b16 %v1053, %v1049
    %v1518 = vpack.c.b16 %v1058, %v1054
    %v1519 = vpack.c.b16 %v1059, %v1055
    %v1520 = vpack.c.b16 %v1060, %v1056
    %v1521 = vpack.c.b16 %v1061, %v1057
    %v1522 = vpack.c.b16 %v1066, %v1062
    %v1523 = vpack.c.b16 %v1067, %v1063
    %v1524 = vpack.c.b16 %v1068, %v1064
    %v1525 = vpack.c.b16 %v1069, %v1065
    %v1526 = vpack.c.b16 %v1074, %v1070
    %v1527 = vpack.c.b16 %v1075, %v1071
    %v1528 = vpack.c.b16 %v1076, %v1072
    %v1529 = vpack.c.b16 %v1077, %v1073
    %v1530 = vpack.c.b16 %v1082, %v1078
    %v1531 = vpack.c.b16 %v1083, %v1079
    %v1532 = vpack.c.b16 %v1084, %v1080
    %v1533 = vpack.c.b16 %v1085, %v1081
    %v1534 = vpack.c.b16 %v1090, %v1086
    %v1535 = vpack.c.b16 %v1091, %v1087
    %v1536 = vpack.c.b16 %v1092, %v1088
    %v1537 = vpack.c.b16 %v1093, %v1089
    %v1538 = vpack.c.b16 %v1098, %v1094
    %v1539 = vpack.c.b16 %v1099, %v1095
    %v1540 = vpack.c.b16 %v1100, %v1096
    %v1541 = vpack.c.b16 %v1101, %v1097
    %v1542 = vpack.c.b16 %v1106, %v1102
    %v1543 = vpack.c.b16 %v1107, %v1103
    %v1544 = vpack.c.b16 %v1108, %v1104
    %v1545 = vpack.c.b16 %v1109, %v1105
    %v1546 = vpack.c.b16 %v1114, %v1110
    %v1547 = vpack.c.b16 %v1115, %v1111
    %v1548 = vpack.c.b16 %v1116, %v1112
    %v1549 = vpack.c.b16 %v1117, %v1113
    %v1550 = vpack.c.b16 %v1122, %v1118
    %v1551 = vpack.c.b16 %v1123, %v1119
    %v1552 = vpack.c.b16 %v1124, %v1120
    %v1553 = vpack.c.b16 %v1125, %v1121
    %v1554 = vpack.c.b16 %v1130, %v1126
    %v1555 = vpack.c.b16 %v1131, %v1127
    %v1556 = vpack.c.b16 %v1132, %v1128
    %v1557 = vpack.c.b16 %v1133, %v1129
    %v1558 = vpack.c.b16 %v1138, %v1134
    %v1559 = vpack.c.b16 %v1139, %v1135
    %v1560 = vpack.c.b16 %v1140, %v1136
    %v1561 = vpack.c.b16 %v1141, %v1137
    %v1562 = vpack.c.b16 %v1146, %v1142
    %v1563 = vpack.c.b16 %v1147, %v1143
    %v1564 = vpack.c.b16 %v1148, %v1144
    %v1565 = vpack.c.b16 %v1149, %v1145
    %v1566 = vpack.c.b16 %v1154, %v1150
    %v1567 = vpack.c.b16 %v1155, %v1151
    %v1568 = vpack.c.b16 %v1156, %v1152
    %v1569 = vpack.c.b16 %v1157, %v1153
    %v1570 = vpack.c.b16 %v1162, %v1158
    %v1571 = vpack.c.b16 %v1163, %v1159
    %v1572 = vpack.c.b16 %v1164, %v1160
    %v1573 = vpack.c.b16 %v1165, %v1161
    %v1574 = vpack.c.b16 %v1170, %v1166
    %v1575 = vpack.c.b16 %v1171, %v1167
    %v1576 = vpack.c.b16 %v1172, %v1168
    %v1577 = vpack.c.b16 %v1173, %v1169
    %v1578 = vpack.c.b16 %v1178, %v1174
    %v1579 = vpack.c.b16 %v1179, %v1175
    %v1580 = vpack.c.b16 %v1180, %v1176
    %v1581 = vpack.c.b16 %v1181, %v1177
    %v1582 = vpack.c.b16 %v1186, %v1182
    %v1583 = vpack.c.b16 %v1187, %v1183
    %v1584 = vpack.c.b16 %v1188, %v1184
    %v1585 = vpack.c.b16 %v1189, %v1185
    %v1586 = vpack.c.b16 %v1194, %v1190
    %v1587 = vpack.c.b16 %v1195, %v1191
    %v1588 = vpack.c.b16 %v1196, %v1192
    %v1589 = vpack.c.b16 %v1197, %v1193
    %v1590 = vpack.c.b16 %v1202, %v1198
    %v1591 = vpack.c.b16 %v1203, %v1199
    %v1592 = vpack.c.b16 %v1204, %v1200
    %v1593 = vpack.c.b16 %v1205, %v1201
    %v1594 = vpack.c.b16 %v1210, %v1206
    %v1595 = vpack.c.b16 %v1211, %v1207
    %v1596 = vpack.c.b16 %v1212, %v1208
    %v1597 = vpack.c.b16 %v1213, %v1209
    %v1598 = vpack.c.b16 %v1218, %v1214
    %v1599 = vpack.c.b16 %v1219, %v1215
    %v1600 = vpack.c.b16 %v1220, %v1216
    %v1601 = vpack.c.b16 %v1221, %v1217
    %v1602 = vpack.c.b16 %v1226, %v1222
    %v1603 = vpack.c.b16 %v1227, %v1223
    %v1604 = vpack.c.b16 %v1228, %v1224
    %v1605 = vpack.c.b16 %v1229, %v1225
    %v1606 = vpack.c.b16 %v1234, %v1230
    %v1607 = vpack.c.b16 %v1235, %v1231
    %v1608 = vpack.c.b16 %v1236, %v1232
    %v1609 = vpack.c.b16 %v1237, %v1233
    %v1610 = vpack.c.b16 %v1242, %v1238
    %v1611 = vpack.c.b16 %v1243, %v1239
    %v1612 = vpack.c.b16 %v1244, %v1240
    %v1613 = vpack.c.b16 %v1245, %v1241
    %v1614 = vpack.c.b16 %v1250, %v1246
    %v1615 = vpack.c.b16 %v1251, %v1247
    %v1616 = vpack.c.b16 %v1252, %v1248
    %v1617 = vpack.c.b16 %v1253, %v1249
    %v1618 = vpack.c.b16 %v1258, %v1254
    %v1619 = vpack.c.b16 %v1259, %v1255
    %v1620 = vpack.c.b16 %v1260, %v1256
    %v1621 = vpack.c.b16 %v1261, %v1257
    %v1622 = vpack.c.b16 %v1266, %v1262
    %v1623 = vpack.c.b16 %v1267, %v1263
    %v1624 = vpack.c.b16 %v1268, %v1264
    %v1625 = vpack.c.b16 %v1269, %v1265
    %v1626 = vpack.c.b16 %v1274, %v1270
    %v1627 = vpack.c.b16 %v1275, %v1271
    %v1628 = vpack.c.b16 %v1276, %v1272
    %v1629 = vpack.c.b16 %v1277, %v1273
    %v1630 = vpack.c.b16 %v1282, %v1278
    %v1631 = vpack.c.b16 %v1283, %v1279
    %v1632 = vpack.c.b16 %v1284, %v1280
    %v1633 = vpack.c.b16 %v1285, %v1281
    %v1634 = vpack.c.b16 %v1290, %v1286
    %v1635 = vpack.c.b16 %v1291, %v1287
    %v1636 = vpack.c.b16 %v1292, %v1288
    %v1637 = vpack.c.b16 %v1293, %v1289
    %v1638 = vpack.c.b16 %v1298, %v1294
    %v1639 = vpack.c.b16 %v1299, %v1295
    %v1640 = vpack.c.b16 %v1300, %v1296
    %v1641 = vpack.c.b16 %v1301, %v1297
    %v1642 = vpack.c.b16 %v1306, %v1302
    %v1643 = vpack.c.b16 %v1307, %v1303
    %v1644 = vpack.c.b16 %v1308, %v1304
    %v1645 = vpack.c.b16 %v1309, %v1305
    %v1646 = vpack.c.b16 %v1314, %v1310
    %v1647 = vpack.c.b16 %v1315, %v1311
    %v1648 = vpack.c.b16 %v1316, %v1312
    %v1649 = vpack.c.b16 %v1317, %v1313
    %v1650 = vpack.c.b16 %v1322, %v1318
    %v1651 = vpack.c.b16 %v1323, %v1319
    %v1652 = vpack.c.b16 %v1324, %v1320
    %v1653 = vpack.c.b16 %v1325, %v1321
    %v1654 = vpack.c.b16 %v1330, %v1326
    %v1655 = vpack.c.b16 %v1331, %v1327
    %v1656 = vpack.c.b16 %v1332, %v1328
    %v1657 = vpack.c.b16 %v1333, %v1329
    %v1658 = vpack.c.b16 %v1338, %v1334
    %v1659 = vpack.c.b16 %v1339, %v1335
    %v1660 = vpack.c.b16 %v1340, %v1336
    %v1661 = vpack.c.b16 %v1341, %v1337
    %v1662 = vpack.c.b16 %v1346, %v1342
    %v1663 = vpack.c.b16 %v1347, %v1343
    %v1664 = vpack.c.b16 %v1348, %v1344
    %v1665 = vpack.c.b16 %v1349, %v1345
    %v1666 = vpack.c.b16 %v1354, %v1350
    %v1667 = vpack.c.b16 %v1355, %v1351
    %v1668 = vpack.c.b16 %v1356, %v1352
    %v1669 = vpack.c.b16 %v1357, %v1353
    %v1670 = vpack.c.b16 %v1362, %v1358
    %v1671 = vpack.c.b16 %v1363, %v1359
    %v1672 = vpack.c.b16 %v1364, %v1360
    %v1673 = vpack.c.b16 %v1365, %v1361
    %v1674 = vpack.c.b16 %v1370, %v1366
    %v1675 = vpack.c.b16 %v1371, %v1367
    %v1676 = vpack.c.b16 %v1372, %v1368
    %v1677 = vpack.c.b16 %v1373, %v1369
    %v1678 = vpack.c.b16 %v1378, %v1374
    %v1679 = vpack.c.b16 %v1379, %v1375
    %v1680 = vpack.c.b16 %v1380, %v1376
    %v1681 = vpack.c.b16 %v1381, %v1377
    %v1682 = vpack.c.b16 %v1386, %v1382
    %v1683 = vpack.c.b16 %v1387, %v1383
    %v1684 = vpack.c.b16 %v1388, %v1384
    %v1685 = vpack.c.b16 %v1389, %v1385
    %v1686 = vpack.c.b16 %v1394, %v1390
    %v1687 = vpack.c.b16 %v1395, %v1391
    %v1688 = vpack.c.b16 %v1396, %v1392
    %v1689 = vpack.c.b16 %v1397, %v1393
    %v1690 = vpack.c.b16 %v1402, %v1398
    %v1691 = vpack.c.b16 %v1403, %v1399
    %v1692 = vpack.c.b16 %v1404, %v1400
    %v1693 = vpack.c.b16 %v1405, %v1401
    %v1694 = vpack.c.b16 %v1410, %v1406
    %v1695 = vpack.c.b16 %v1411, %v1407
    %v1696 = vpack.c.b16 %v1412, %v1408
    %v1697 = vpack.c.b16 %v1413, %v1409
    %v1698 = vpack.c.b16 %v1418, %v1414
    %v1699 = vpack.c.b16 %v1419, %v1415
    %v1700 = vpack.c.b16 %v1420, %v1416
    %v1701 = vpack.c.b16 %v1421, %v1417
    %v1702 = vpack.c.b16 %v1426, %v1422
    %v1703 = vpack.c.b16 %v1427, %v1423
    %v1704 = vpack.c.b16 %v1428, %v1424
    %v1705 = vpack.c.b16 %v1429, %v1425
    %v1706 = vpack.c.b16 %v1434, %v1430
    %v1707 = vpack.c.b16 %v1435, %v1431
    %v1708 = vpack.c.b16 %v1436, %v1432
    %v1709 = vpack.c.b16 %v1437, %v1433
    %v1710 = vpack.c.b16 %v1442, %v1438
    %v1711 = vpack.c.b16 %v1443, %v1439
    %v1712 = vpack.c.b16 %v1444, %v1440
    %v1713 = vpack.c.b16 %v1445, %v1441
    %v1714 = vpack.c.b16 %v1450, %v1446
    %v1715 = vpack.c.b16 %v1451, %v1447
    %v1716 = vpack.c.b16 %v1452, %v1448
    %v1717 = vpack.c.b16 %v1453, %v1449
    %v1718 = vpack.c.b16 %v1458, %v1454
    %v1719 = vpack.c.b16 %v1459, %v1455
    %v1720 = vpack.c.b16 %v1460, %v1456
    %v1721 = vpack.c.b16 %v1461, %v1457
    %v1722 = vpack.c.b16 %v1466, %v1462
    %v1723 = vpack.c.b16 %v1467, %v1463
    %v1724 = vpack.c.b16 %v1468, %v1464
    %v1725 = vpack.c.b16 %v1469, %v1465
    %1982 = vmatprep.subr.bf16.mxu0 %v1471
    %1983 = vmatpush1.bf16.msra.mxu0 %v1470
    %1984 = vmatprep.subr.bf16.mxu0 %v1475
    %1985 = vmatpush1.bf16.msra.mxu0 %v1474
    %1986 = vmatprep.subr.bf16.mxu0 %v1479
    %1987 = vmatpush1.bf16.msra.mxu0 %v1478
    %1988 = vmatprep.subr.bf16.mxu0 %v1483
    %1989 = vmatpush1.bf16.msra.mxu0 %v1482
    %1990 = vmatprep.subr.bf16.mxu0 %v1487
    %1991 = vmatpush1.bf16.msra.mxu0 %v1486
    %1992 = vmatprep.subr.bf16.mxu0 %v1491
    %1993 = vmatpush1.bf16.msra.mxu0 %v1490
    %1994 = vmatprep.subr.bf16.mxu0 %v1495
    %1995 = vmatpush1.bf16.msra.mxu0 %v1494
    %1996 = vmatprep.subr.bf16.mxu0 %v1499
    %1997 = vmatpush1.bf16.msra.mxu0 %v1498
    %1998 = vmatprep.subr.bf16.mxu0 %v1503
    %1999 = vmatpush1.bf16.msra.mxu0 %v1502
    %2000 = vmatprep.subr.bf16.mxu0 %v1507
    %2001 = vmatpush1.bf16.msra.mxu0 %v1506
    %2002 = vmatprep.subr.bf16.mxu0 %v1511
    %2003 = vmatpush1.bf16.msra.mxu0 %v1510
    %2004 = vmatprep.subr.bf16.mxu0 %v1515
    %2005 = vmatpush1.bf16.msra.mxu0 %v1514
    %2006 = vmatprep.subr.bf16.mxu0 %v1519
    %2007 = vmatpush1.bf16.msra.mxu0 %v1518
    %2008 = vmatprep.subr.bf16.mxu0 %v1523
    %2009 = vmatpush1.bf16.msra.mxu0 %v1522
    %2010 = vmatprep.subr.bf16.mxu0 %v1527
    %2011 = vmatpush1.bf16.msra.mxu0 %v1526
    %2012 = vmatprep.subr.bf16.mxu0 %v1531
    %2013 = vmatpush1.bf16.msra.mxu0 %v1530
    %2014 = vmatprep.mubr.bf16.mxu0 %v417
    %2015 = vmatmul.mubr.bf16.gmra.mrb[0].mxu0 %v416
    %v2016 = vpop.f32.mrb[0].mxu0
    %v2017 = vadd.f32 %v685, %v2016
    %v2018 = vpop.f32.mrb[0].mxu0
    %v2019 = vadd.f32 %v689, %v2018
    %v2020 = vpop.f32.mrb[0].mxu0
    %v2021 = vpop.f32.mrb[0].mxu0
    %2022 = vdwg.mxu0
    %2023 = vmatprep.subr.bf16.mxu0 %v1535
    %2024 = vmatpush1.bf16.msra.mxu0 %v1534
    %2025 = vmatprep.subr.bf16.mxu0 %v1539
    %2026 = vmatpush1.bf16.msra.mxu0 %v1538
    %2027 = vmatprep.subr.bf16.mxu0 %v1543
    %2028 = vmatpush1.bf16.msra.mxu0 %v1542
    %2029 = vmatprep.subr.bf16.mxu0 %v1547
    %2030 = vmatpush1.bf16.msra.mxu0 %v1546
    %2031 = vmatprep.subr.bf16.mxu0 %v1551
    %2032 = vmatpush1.bf16.msra.mxu0 %v1550
    %2033 = vmatprep.subr.bf16.mxu0 %v1555
    %2034 = vmatpush1.bf16.msra.mxu0 %v1554
    %2035 = vmatprep.subr.bf16.mxu0 %v1559
    %2036 = vmatpush1.bf16.msra.mxu0 %v1558
    %2037 = vmatprep.subr.bf16.mxu0 %v1563
    %2038 = vmatpush1.bf16.msra.mxu0 %v1562
    %2039 = vmatprep.subr.bf16.mxu0 %v1567
    %2040 = vmatpush1.bf16.msra.mxu0 %v1566
    %2041 = vmatprep.subr.bf16.mxu0 %v1571
    %2042 = vmatpush1.bf16.msra.mxu0 %v1570
    %2043 = vmatprep.subr.bf16.mxu0 %v1575
    %2044 = vmatpush1.bf16.msra.mxu0 %v1574
    %2045 = vmatprep.subr.bf16.mxu0 %v1579
    %2046 = vmatpush1.bf16.msra.mxu0 %v1578
    %2047 = vmatprep.subr.bf16.mxu0 %v1583
    %2048 = vmatpush1.bf16.msra.mxu0 %v1582
    %2049 = vmatprep.subr.bf16.mxu0 %v1587
    %2050 = vmatpush1.bf16.msra.mxu0 %v1586
    %2051 = vmatprep.subr.bf16.mxu0 %v1591
    %2052 = vmatpush1.bf16.msra.mxu0 %v1590
    %2053 = vmatprep.subr.bf16.mxu0 %v1595
    %2054 = vmatpush1.bf16.msra.mxu0 %v1594
    %2055 = vmatprep.mubr.bf16.mxu0 %v419
    %2056 = vmatmul.mubr.bf16.gmra.mrb[0].mxu0 %v418
    %v2057 = vpop.f32.mrb[0].mxu0
    %v2058 = vadd.f32 %v2017, %v2057
    %v2059 = vpop.f32.mrb[0].mxu0
    %v2060 = vadd.f32 %v2019, %v2059
    %v2061 = vpop.f32.mrb[0].mxu0
    %v2062 = vpop.f32.mrb[0].mxu0
    %2063 = vdwg.mxu0
    %2064 = vmatprep.subr.bf16.mxu0 %v1599
    %2065 = vmatpush1.bf16.msra.mxu0 %v1598
    %2066 = vmatprep.subr.bf16.mxu0 %v1603
    %2067 = vmatpush1.bf16.msra.mxu0 %v1602
    %2068 = vmatprep.subr.bf16.mxu0 %v1607
    %2069 = vmatpush1.bf16.msra.mxu0 %v1606
    %2070 = vmatprep.subr.bf16.mxu0 %v1611
    %2071 = vmatpush1.bf16.msra.mxu0 %v1610
    %2072 = vmatprep.subr.bf16.mxu0 %v1615
    %2073 = vmatpush1.bf16.msra.mxu0 %v1614
    %2074 = vmatprep.subr.bf16.mxu0 %v1619
    %2075 = vmatpush1.bf16.msra.mxu0 %v1618
    %2076 = vmatprep.subr.bf16.mxu0 %v1623
    %2077 = vmatpush1.bf16.msra.mxu0 %v1622
    %2078 = vmatprep.subr.bf16.mxu0 %v1627
    %2079 = vmatpush1.bf16.msra.mxu0 %v1626
    %2080 = vmatprep.subr.bf16.mxu0 %v1631
    %2081 = vmatpush1.bf16.msra.mxu0 %v1630
    %2082 = vmatprep.subr.bf16.mxu0 %v1635
    %2083 = vmatpush1.bf16.msra.mxu0 %v1634
    %2084 = vmatprep.subr.bf16.mxu0 %v1639
    %2085 = vmatpush1.bf16.msra.mxu0 %v1638
    %2086 = vmatprep.subr.bf16.mxu0 %v1643
    %2087 = vmatpush1.bf16.msra.mxu0 %v1642
    %2088 = vmatprep.subr.bf16.mxu0 %v1647
    %2089 = vmatpush1.bf16.msra.mxu0 %v1646
    %2090 = vmatprep.subr.bf16.mxu0 %v1651
    %2091 = vmatpush1.bf16.msra.mxu0 %v1650
    %2092 = vmatprep.subr.bf16.mxu0 %v1655
    %2093 = vmatpush1.bf16.msra.mxu0 %v1654
    %2094 = vmatprep.subr.bf16.mxu0 %v1659
    %2095 = vmatpush1.bf16.msra.mxu0 %v1658
    %2096 = vmatprep.mubr.bf16.mxu0 %v421
    %2097 = vmatmul.mubr.bf16.gmra.mrb[0].mxu0 %v420
    %v2098 = vpop.f32.mrb[0].mxu0
    %v2099 = vadd.f32 %v2058, %v2098
    %v2100 = vpop.f32.mrb[0].mxu0
    %v2101 = vadd.f32 %v2060, %v2100
    %v2102 = vpop.f32.mrb[0].mxu0
    %v2103 = vpop.f32.mrb[0].mxu0
    %2104 = vdwg.mxu0
    %2105 = vmatprep.subr.bf16.mxu0 %v1663
    %2106 = vmatpush1.bf16.msra.mxu0 %v1662
    %2107 = vmatprep.subr.bf16.mxu0 %v1667
    %2108 = vmatpush1.bf16.msra.mxu0 %v1666
    %2109 = vmatprep.subr.bf16.mxu0 %v1671
    %2110 = vmatpush1.bf16.msra.mxu0 %v1670
    %2111 = vmatprep.subr.bf16.mxu0 %v1675
    %2112 = vmatpush1.bf16.msra.mxu0 %v1674
    %2113 = vmatprep.subr.bf16.mxu0 %v1679
    %2114 = vmatpush1.bf16.msra.mxu0 %v1678
    %2115 = vmatprep.subr.bf16.mxu0 %v1683
    %2116 = vmatpush1.bf16.msra.mxu0 %v1682
    %2117 = vmatprep.subr.bf16.mxu0 %v1687
    %2118 = vmatpush1.bf16.msra.mxu0 %v1686
    %2119 = vmatprep.subr.bf16.mxu0 %v1691
    %2120 = vmatpush1.bf16.msra.mxu0 %v1690
    %2121 = vmatprep.subr.bf16.mxu0 %v1695
    %2122 = vmatpush1.bf16.msra.mxu0 %v1694
    %2123 = vmatprep.subr.bf16.mxu0 %v1699
    %2124 = vmatpush1.bf16.msra.mxu0 %v1698
    %2125 = vmatprep.subr.bf16.mxu0 %v1703
    %2126 = vmatpush1.bf16.msra.mxu0 %v1702
    %2127 = vmatprep.subr.bf16.mxu0 %v1707
    %2128 = vmatpush1.bf16.msra.mxu0 %v1706
    %2129 = vmatprep.subr.bf16.mxu0 %v1711
    %2130 = vmatpush1.bf16.msra.mxu0 %v1710
    %2131 = vmatprep.subr.bf16.mxu0 %v1715
    %2132 = vmatpush1.bf16.msra.mxu0 %v1714
    %2133 = vmatprep.subr.bf16.mxu0 %v1719
    %2134 = vmatpush1.bf16.msra.mxu0 %v1718
    %2135 = vmatprep.subr.bf16.mxu0 %v1723
    %2136 = vmatpush1.bf16.msra.mxu0 %v1722
    %2137 = vmatprep.mubr.bf16.mxu0 %v423
    %2138 = vmatmul.mubr.bf16.gmra.mrb[0].mxu0 %v422
    %v2139 = vpop.f32.mrb[0].mxu0
    %v2140 = vadd.f32 %v2099, %v2139
    %v2141 = vpop.f32.mrb[0].mxu0
    %v2142 = vadd.f32 %v2101, %v2141
    %v2143 = vpop.f32.mrb[0].mxu0
    %v2144 = vpop.f32.mrb[0].mxu0
    %2145 = vdwg.mxu0
    %2146 = vmatprep.subr.bf16.mxu0 %v1473
    %2147 = vmatpush1.bf16.msra.mxu0 %v1472
    %2148 = vmatprep.subr.bf16.mxu0 %v1477
    %2149 = vmatpush1.bf16.msra.mxu0 %v1476
    %2150 = vmatprep.subr.bf16.mxu0 %v1481
    %2151 = vmatpush1.bf16.msra.mxu0 %v1480
    %2152 = vmatprep.subr.bf16.mxu0 %v1485
    %2153 = vmatpush1.bf16.msra.mxu0 %v1484
    %2154 = vmatprep.subr.bf16.mxu0 %v1489
    %2155 = vmatpush1.bf16.msra.mxu0 %v1488
    %2156 = vmatprep.subr.bf16.mxu0 %v1493
    %2157 = vmatpush1.bf16.msra.mxu0 %v1492
    %2158 = vmatprep.subr.bf16.mxu0 %v1497
    %2159 = vmatpush1.bf16.msra.mxu0 %v1496
    %2160 = vmatprep.subr.bf16.mxu0 %v1501
    %2161 = vmatpush1.bf16.msra.mxu0 %v1500
    %2162 = vmatprep.subr.bf16.mxu0 %v1505
    %2163 = vmatpush1.bf16.msra.mxu0 %v1504
    %2164 = vmatprep.subr.bf16.mxu0 %v1509
    %2165 = vmatpush1.bf16.msra.mxu0 %v1508
    %2166 = vmatprep.subr.bf16.mxu0 %v1513
    %2167 = vmatpush1.bf16.msra.mxu0 %v1512
    %2168 = vmatprep.subr.bf16.mxu0 %v1517
    %2169 = vmatpush1.bf16.msra.mxu0 %v1516
    %2170 = vmatprep.subr.bf16.mxu0 %v1521
    %2171 = vmatpush1.bf16.msra.mxu0 %v1520
    %2172 = vmatprep.subr.bf16.mxu0 %v1525
    %2173 = vmatpush1.bf16.msra.mxu0 %v1524
    %2174 = vmatprep.subr.bf16.mxu0 %v1529
    %2175 = vmatpush1.bf16.msra.mxu0 %v1528
    %2176 = vmatprep.subr.bf16.mxu0 %v1533
    %2177 = vmatpush1.bf16.msra.mxu0 %v1532
    %2178 = vmatprep.mubr.bf16.mxu0 %v417
    %2179 = vmatmul.mubr.bf16.gmra.mrb[0].mxu0 %v416
    %v2180 = vpop.f32.mrb[0].mxu0
    %v2181 = vadd.f32 %v693, %v2180
    %v2182 = vpop.f32.mrb[0].mxu0
    %v2183 = vadd.f32 %v697, %v2182
    %v2184 = vpop.f32.mrb[0].mxu0
    %v2185 = vpop.f32.mrb[0].mxu0
    %2186 = vdwg.mxu0
    %2187 = vmatprep.subr.bf16.mxu0 %v1537
    %2188 = vmatpush1.bf16.msra.mxu0 %v1536
    %2189 = vmatprep.subr.bf16.mxu0 %v1541
    %2190 = vmatpush1.bf16.msra.mxu0 %v1540
    %2191 = vmatprep.subr.bf16.mxu0 %v1545
    %2192 = vmatpush1.bf16.msra.mxu0 %v1544
    %2193 = vmatprep.subr.bf16.mxu0 %v1549
    %2194 = vmatpush1.bf16.msra.mxu0 %v1548
    %2195 = vmatprep.subr.bf16.mxu0 %v1553
    %2196 = vmatpush1.bf16.msra.mxu0 %v1552
    %2197 = vmatprep.subr.bf16.mxu0 %v1557
    %2198 = vmatpush1.bf16.msra.mxu0 %v1556
    %2199 = vmatprep.subr.bf16.mxu0 %v1561
    %2200 = vmatpush1.bf16.msra.mxu0 %v1560
    %2201 = vmatprep.subr.bf16.mxu0 %v1565
    %2202 = vmatpush1.bf16.msra.mxu0 %v1564
    %2203 = vmatprep.subr.bf16.mxu0 %v1569
    %2204 = vmatpush1.bf16.msra.mxu0 %v1568
    %2205 = vmatprep.subr.bf16.mxu0 %v1573
    %2206 = vmatpush1.bf16.msra.mxu0 %v1572
    %2207 = vmatprep.subr.bf16.mxu0 %v1577
    %2208 = vmatpush1.bf16.msra.mxu0 %v1576
    %2209 = vmatprep.subr.bf16.mxu0 %v1581
    %2210 = vmatpush1.bf16.msra.mxu0 %v1580
    %2211 = vmatprep.subr.bf16.mxu0 %v1585
    %2212 = vmatpush1.bf16.msra.mxu0 %v1584
    %2213 = vmatprep.subr.bf16.mxu0 %v1589
    %2214 = vmatpush1.bf16.msra.mxu0 %v1588
    %2215 = vmatprep.subr.bf16.mxu0 %v1593
    %2216 = vmatpush1.bf16.msra.mxu0 %v1592
    %2217 = vmatprep.subr.bf16.mxu0 %v1597
    %2218 = vmatpush1.bf16.msra.mxu0 %v1596
    %2219 = vmatprep.mubr.bf16.mxu0 %v419
    %2220 = vmatmul.mubr.bf16.gmra.mrb[0].mxu0 %v418
    %v2221 = vpop.f32.mrb[0].mxu0
    %v2222 = vadd.f32 %v2181, %v2221
    %v2223 = vpop.f32.mrb[0].mxu0
    %v2224 = vadd.f32 %v2183, %v2223
    %v2225 = vpop.f32.mrb[0].mxu0
    %v2226 = vpop.f32.mrb[0].mxu0
    %2227 = vdwg.mxu0
    %2228 = vmatprep.subr.bf16.mxu0 %v1601
    %2229 = vmatpush1.bf16.msra.mxu0 %v1600
    %2230 = vmatprep.subr.bf16.mxu0 %v1605
    %2231 = vmatpush1.bf16.msra.mxu0 %v1604
    %2232 = vmatprep.subr.bf16.mxu0 %v1609
    %2233 = vmatpush1.bf16.msra.mxu0 %v1608
    %2234 = vmatprep.subr.bf16.mxu0 %v1613
    %2235 = vmatpush1.bf16.msra.mxu0 %v1612
    %2236 = vmatprep.subr.bf16.mxu0 %v1617
    %2237 = vmatpush1.bf16.msra.mxu0 %v1616
    %2238 = vmatprep.subr.bf16.mxu0 %v1621
    %2239 = vmatpush1.bf16.msra.mxu0 %v1620
    %2240 = vmatprep.subr.bf16.mxu0 %v1625
    %2241 = vmatpush1.bf16.msra.mxu0 %v1624
    %2242 = vmatprep.subr.bf16.mxu0 %v1629
    %2243 = vmatpush1.bf16.msra.mxu0 %v1628
    %2244 = vmatprep.subr.bf16.mxu0 %v1633
    %2245 = vmatpush1.bf16.msra.mxu0 %v1632
    %2246 = vmatprep.subr.bf16.mxu0 %v1637
    %2247 = vmatpush1.bf16.msra.mxu0 %v1636
    %2248 = vmatprep.subr.bf16.mxu0 %v1641
    %2249 = vmatpush1.bf16.msra.mxu0 %v1640
    %2250 = vmatprep.subr.bf16.mxu0 %v1645
    %2251 = vmatpush1.bf16.msra.mxu0 %v1644
    %2252 = vmatprep.subr.bf16.mxu0 %v1649
    %2253 = vmatpush1.bf16.msra.mxu0 %v1648
    %2254 = vmatprep.subr.bf16.mxu0 %v1653
    %2255 = vmatpush1.bf16.msra.mxu0 %v1652
    %2256 = vmatprep.subr.bf16.mxu0 %v1657
    %2257 = vmatpush1.bf16.msra.mxu0 %v1656
    %2258 = vmatprep.subr.bf16.mxu0 %v1661
    %2259 = vmatpush1.bf16.msra.mxu0 %v1660
    %2260 = vmatprep.mubr.bf16.mxu0 %v421
    %2261 = vmatmul.mubr.bf16.gmra.mrb[0].mxu0 %v420
    %v2262 = vpop.f32.mrb[0].mxu0
    %v2263 = vadd.f32 %v2222, %v2262
    %v2264 = vpop.f32.mrb[0].mxu0
    %v2265 = vadd.f32 %v2224, %v2264
    %v2266 = vpop.f32.mrb[0].mxu0
    %v2267 = vpop.f32.mrb[0].mxu0
    %2268 = vdwg.mxu0
    %2269 = vmatprep.subr.bf16.mxu0 %v1665
    %2270 = vmatpush1.bf16.msra.mxu0 %v1664
    %2271 = vmatprep.subr.bf16.mxu0 %v1669
    %2272 = vmatpush1.bf16.msra.mxu0 %v1668
    %2273 = vmatprep.subr.bf16.mxu0 %v1673
    %2274 = vmatpush1.bf16.msra.mxu0 %v1672
    %2275 = vmatprep.subr.bf16.mxu0 %v1677
    %2276 = vmatpush1.bf16.msra.mxu0 %v1676
    %2277 = vmatprep.subr.bf16.mxu0 %v1681
    %2278 = vmatpush1.bf16.msra.mxu0 %v1680
    %2279 = vmatprep.subr.bf16.mxu0 %v1685
    %2280 = vmatpush1.bf16.msra.mxu0 %v1684
    %2281 = vmatprep.subr.bf16.mxu0 %v1689
    %2282 = vmatpush1.bf16.msra.mxu0 %v1688
    %2283 = vmatprep.subr.bf16.mxu0 %v1693
    %2284 = vmatpush1.bf16.msra.mxu0 %v1692
    %2285 = vmatprep.subr.bf16.mxu0 %v1697
    %2286 = vmatpush1.bf16.msra.mxu0 %v1696
    %2287 = vmatprep.subr.bf16.mxu0 %v1701
    %2288 = vmatpush1.bf16.msra.mxu0 %v1700
    %2289 = vmatprep.subr.bf16.mxu0 %v1705
    %2290 = vmatpush1.bf16.msra.mxu0 %v1704
    %2291 = vmatprep.subr.bf16.mxu0 %v1709
    %2292 = vmatpush1.bf16.msra.mxu0 %v1708
    %2293 = vmatprep.subr.bf16.mxu0 %v1713
    %2294 = vmatpush1.bf16.msra.mxu0 %v1712
    %2295 = vmatprep.subr.bf16.mxu0 %v1717
    %2296 = vmatpush1.bf16.msra.mxu0 %v1716
    %2297 = vmatprep.subr.bf16.mxu0 %v1721
    %2298 = vmatpush1.bf16.msra.mxu0 %v1720
    %2299 = vmatprep.subr.bf16.mxu0 %v1725
    %2300 = vmatpush1.bf16.msra.mxu0 %v1724
    %2301 = vmatprep.mubr.bf16.mxu0 %v423
    %2302 = vmatmul.mubr.bf16.gmra.mrb[0].mxu0 %v422
    %v2303 = vpop.f32.mrb[0].mxu0
    %v2304 = vadd.f32 %v2263, %v2303
    %v2305 = vpop.f32.mrb[0].mxu0
    %v2306 = vadd.f32 %v2265, %v2305
    %v2307 = vpop.f32.mrb[0].mxu0
    %v2308 = vpop.f32.mrb[0].mxu0
    %2309 = vdwg.mxu0
    %v2310 = vmax.f32 %v2140, 0.0
    %v2311 = vmax.f32 %v2142, 0.0
    %v2312 = vmax.f32 %v2304, 0.0
    %v2313 = vmax.f32 %v2306, 0.0
    %v2314 = vpack.c.bf16 %v2310, %v2310
    %v2315 = vpack.c.bf16 %v2311, %v2311
    %v2316 = vpack.c.bf16 %v2312, %v2312
    %v2317 = vpack.c.bf16 %v2313, %v2313
    %v2318 = vld [vmem:[#allocation7] sm:$0xff]
    %v2319 = vld [vmem:[#allocation7 + $0x8] sm:$0xff]
    %v2320 = vld [vmem:[#allocation7 + $0x10] sm:$0xff]
    %v2321 = vld [vmem:[#allocation7 + $0x18] sm:$0xff]
    %v2322 = vld [vmem:[#allocation7 + $0x20] sm:$0xff]
    %v2323 = vld [vmem:[#allocation7 + $0x28] sm:$0xff]
    %v2324 = vld [vmem:[#allocation7 + $0x30] sm:$0xff]
    %v2325 = vld [vmem:[#allocation7 + $0x38] sm:$0xff]
    %v2326 = vld [vmem:[#allocation7 + $0x40] sm:$0xff]
    %v2327 = vld [vmem:[#allocation7 + $0x48] sm:$0xff]
    %v2328 = vld [vmem:[#allocation7 + $0x50] sm:$0xff]
    %v2329 = vld [vmem:[#allocation7 + $0x58] sm:$0xff]
    %v2330 = vld [vmem:[#allocation7 + $0x60] sm:$0xff]
    %v2331 = vld [vmem:[#allocation7 + $0x68] sm:$0xff]
    %v2332 = vld [vmem:[#allocation7 + $0x70] sm:$0xff]
    %v2333 = vld [vmem:[#allocation7 + $0x78] sm:$0xff]
    %v2334 = vld [vmem:[#allocation7 + $0x80] sm:$0xff]
    %v2335 = vld [vmem:[#allocation7 + $0x88] sm:$0xff]
    %v2336 = vld [vmem:[#allocation7 + $0x90] sm:$0xff]
    %v2337 = vld [vmem:[#allocation7 + $0x98] sm:$0xff]
    %v2338 = vld [vmem:[#allocation7 + $0xa0] sm:$0xff]
    %v2339 = vld [vmem:[#allocation7 + $0xa8] sm:$0xff]
    %v2340 = vld [vmem:[#allocation7 + $0xb0] sm:$0xff]
    %v2341 = vld [vmem:[#allocation7 + $0xb8] sm:$0xff]
    %v2342 = vld [vmem:[#allocation7 + $0xc0] sm:$0xff]
    %v2343 = vld [vmem:[#allocation7 + $0xc8] sm:$0xff]
    %v2344 = vld [vmem:[#allocation7 + $0xd0] sm:$0xff]
    %v2345 = vld [vmem:[#allocation7 + $0xd8] sm:$0xff]
    %v2346 = vld [vmem:[#allocation7 + $0xe0] sm:$0xff]
    %v2347 = vld [vmem:[#allocation7 + $0xe8] sm:$0xff]
    %v2348 = vld [vmem:[#allocation7 + $0xf0] sm:$0xff]
    %v2349 = vld [vmem:[#allocation7 + $0xf8] sm:$0xff]
    %v2350 = vld [vmem:[#allocation7 + $0x100] sm:$0xff]
    %v2351 = vld [vmem:[#allocation7 + $0x108] sm:$0xff]
    %v2352 = vld [vmem:[#allocation7 + $0x110] sm:$0xff]
    %v2353 = vld [vmem:[#allocation7 + $0x118] sm:$0xff]
    %v2354 = vld [vmem:[#allocation7 + $0x120] sm:$0xff]
    %v2355 = vld [vmem:[#allocation7 + $0x128] sm:$0xff]
    %v2356 = vld [vmem:[#allocation7 + $0x130] sm:$0xff]
    %v2357 = vld [vmem:[#allocation7 + $0x138] sm:$0xff]
    %v2358 = vld [vmem:[#allocation7 + $0x140] sm:$0xff]
    %v2359 = vld [vmem:[#allocation7 + $0x148] sm:$0xff]
    %v2360 = vld [vmem:[#allocation7 + $0x150] sm:$0xff]
    %v2361 = vld [vmem:[#allocation7 + $0x158] sm:$0xff]
    %v2362 = vld [vmem:[#allocation7 + $0x160] sm:$0xff]
    %v2363 = vld [vmem:[#allocation7 + $0x168] sm:$0xff]
    %v2364 = vld [vmem:[#allocation7 + $0x170] sm:$0xff]
    %v2365 = vld [vmem:[#allocation7 + $0x178] sm:$0xff]
    %v2366 = vld [vmem:[#allocation7 + $0x180] sm:$0xff]
    %v2367 = vld [vmem:[#allocation7 + $0x188] sm:$0xff]
    %v2368 = vld [vmem:[#allocation7 + $0x190] sm:$0xff]
    %v2369 = vld [vmem:[#allocation7 + $0x198] sm:$0xff]
    %v2370 = vld [vmem:[#allocation7 + $0x1a0] sm:$0xff]
    %v2371 = vld [vmem:[#allocation7 + $0x1a8] sm:$0xff]
    %v2372 = vld [vmem:[#allocation7 + $0x1b0] sm:$0xff]
    %v2373 = vld [vmem:[#allocation7 + $0x1b8] sm:$0xff]
    %v2374 = vld [vmem:[#allocation7 + $0x1c0] sm:$0xff]
    %v2375 = vld [vmem:[#allocation7 + $0x1c8] sm:$0xff]
    %v2376 = vld [vmem:[#allocation7 + $0x1d0] sm:$0xff]
    %v2377 = vld [vmem:[#allocation7 + $0x1d8] sm:$0xff]
    %v2378 = vld [vmem:[#allocation7 + $0x1e0] sm:$0xff]
    %v2379 = vld [vmem:[#allocation7 + $0x1e8] sm:$0xff]
    %v2380 = vld [vmem:[#allocation7 + $0x1f0] sm:$0xff]
    %v2381 = vld [vmem:[#allocation7 + $0x1f8] sm:$0xff]
    %v2382 = vld [vmem:[%s6] sm:$0x3]
    %v2384 = vlaneseq
    %v2385 = vshrl.u32 %v2384, 7
    %v2386 = vsub.s32 0, %v2385
    %v2387 = vrot.slane %v2382, %v2386
    %v2388 = vlaneseq
    %v2389 = vshrl.u32 %v2388, 7
    %v2390 = vsub.s32 1, %v2389
    %v2391 = vrot.slane %v2382, %v2390
    %v2458 = vunpack.c.l.b16 %v2318
    %v2459 = vunpack.c.h.b16 %v2318
    %v2460 = vunpack.c.l.b16 %v2319
    %v2461 = vunpack.c.h.b16 %v2319
    %v2462 = vunpack.c.l.b16 %v2320
    %v2463 = vunpack.c.h.b16 %v2320
    %v2464 = vunpack.c.l.b16 %v2321
    %v2465 = vunpack.c.h.b16 %v2321
    %v2466 = vunpack.c.l.b16 %v2322
    %v2467 = vunpack.c.h.b16 %v2322
    %v2468 = vunpack.c.l.b16 %v2323
    %v2469 = vunpack.c.h.b16 %v2323
    %v2470 = vunpack.c.l.b16 %v2324
    %v2471 = vunpack.c.h.b16 %v2324
    %v2472 = vunpack.c.l.b16 %v2325
    %v2473 = vunpack.c.h.b16 %v2325
    %v2474 = vunpack.c.l.b16 %v2326
    %v2475 = vunpack.c.h.b16 %v2326
    %v2476 = vunpack.c.l.b16 %v2327
    %v2477 = vunpack.c.h.b16 %v2327
    %v2478 = vunpack.c.l.b16 %v2328
    %v2479 = vunpack.c.h.b16 %v2328
    %v2480 = vunpack.c.l.b16 %v2329
    %v2481 = vunpack.c.h.b16 %v2329
    %v2482 = vunpack.c.l.b16 %v2330
    %v2483 = vunpack.c.h.b16 %v2330
    %v2484 = vunpack.c.l.b16 %v2331
    %v2485 = vunpack.c.h.b16 %v2331
    %v2486 = vunpack.c.l.b16 %v2332
    %v2487 = vunpack.c.h.b16 %v2332
    %v2488 = vunpack.c.l.b16 %v2333
    %v2489 = vunpack.c.h.b16 %v2333
    %v2490 = vunpack.c.l.b16 %v2334
    %v2491 = vunpack.c.h.b16 %v2334
    %v2492 = vunpack.c.l.b16 %v2335
    %v2493 = vunpack.c.h.b16 %v2335
    %v2494 = vunpack.c.l.b16 %v2336
    %v2495 = vunpack.c.h.b16 %v2336
    %v2496 = vunpack.c.l.b16 %v2337
    %v2497 = vunpack.c.h.b16 %v2337
    %v2498 = vunpack.c.l.b16 %v2338
    %v2499 = vunpack.c.h.b16 %v2338
    %v2500 = vunpack.c.l.b16 %v2339
    %v2501 = vunpack.c.h.b16 %v2339
    %v2502 = vunpack.c.l.b16 %v2340
    %v2503 = vunpack.c.h.b16 %v2340
    %v2504 = vunpack.c.l.b16 %v2341
    %v2505 = vunpack.c.h.b16 %v2341
    %v2506 = vunpack.c.l.b16 %v2342
    %v2507 = vunpack.c.h.b16 %v2342
    %v2508 = vunpack.c.l.b16 %v2343
    %v2509 = vunpack.c.h.b16 %v2343
    %v2510 = vunpack.c.l.b16 %v2344
    %v2511 = vunpack.c.h.b16 %v2344
    %v2512 = vunpack.c.l.b16 %v2345
    %v2513 = vunpack.c.h.b16 %v2345
    %v2514 = vunpack.c.l.b16 %v2346
    %v2515 = vunpack.c.h.b16 %v2346
    %v2516 = vunpack.c.l.b16 %v2347
    %v2517 = vunpack.c.h.b16 %v2347
    %v2518 = vunpack.c.l.b16 %v2348
    %v2519 = vunpack.c.h.b16 %v2348
    %v2520 = vunpack.c.l.b16 %v2349
    %v2521 = vunpack.c.h.b16 %v2349
    %v2522 = vunpack.c.l.b16 %v2350
    %v2523 = vunpack.c.h.b16 %v2350
    %v2524 = vunpack.c.l.b16 %v2351
    %v2525 = vunpack.c.h.b16 %v2351
    %v2526 = vunpack.c.l.b16 %v2352
    %v2527 = vunpack.c.h.b16 %v2352
    %v2528 = vunpack.c.l.b16 %v2353
    %v2529 = vunpack.c.h.b16 %v2353
    %v2530 = vunpack.c.l.b16 %v2354
    %v2531 = vunpack.c.h.b16 %v2354
    %v2532 = vunpack.c.l.b16 %v2355
    %v2533 = vunpack.c.h.b16 %v2355
    %v2534 = vunpack.c.l.b16 %v2356
    %v2535 = vunpack.c.h.b16 %v2356
    %v2536 = vunpack.c.l.b16 %v2357
    %v2537 = vunpack.c.h.b16 %v2357
    %v2538 = vunpack.c.l.b16 %v2358
    %v2539 = vunpack.c.h.b16 %v2358
    %v2540 = vunpack.c.l.b16 %v2359
    %v2541 = vunpack.c.h.b16 %v2359
    %v2542 = vunpack.c.l.b16 %v2360
    %v2543 = vunpack.c.h.b16 %v2360
    %v2544 = vunpack.c.l.b16 %v2361
    %v2545 = vunpack.c.h.b16 %v2361
    %v2546 = vunpack.c.l.b16 %v2362
    %v2547 = vunpack.c.h.b16 %v2362
    %v2548 = vunpack.c.l.b16 %v2363
    %v2549 = vunpack.c.h.b16 %v2363
    %v2550 = vunpack.c.l.b16 %v2364
    %v2551 = vunpack.c.h.b16 %v2364
    %v2552 = vunpack.c.l.b16 %v2365
    %v2553 = vunpack.c.h.b16 %v2365
    %v2554 = vunpack.c.l.b16 %v2366
    %v2555 = vunpack.c.h.b16 %v2366
    %v2556 = vunpack.c.l.b16 %v2367
    %v2557 = vunpack.c.h.b16 %v2367
    %v2558 = vunpack.c.l.b16 %v2368
    %v2559 = vunpack.c.h.b16 %v2368
    %v2560 = vunpack.c.l.b16 %v2369
    %v2561 = vunpack.c.h.b16 %v2369
    %v2562 = vunpack.c.l.b16 %v2370
    %v2563 = vunpack.c.h.b16 %v2370
    %v2564 = vunpack.c.l.b16 %v2371
    %v2565 = vunpack.c.h.b16 %v2371
    %v2566 = vunpack.c.l.b16 %v2372
    %v2567 = vunpack.c.h.b16 %v2372
    %v2568 = vunpack.c.l.b16 %v2373
    %v2569 = vunpack.c.h.b16 %v2373
    %v2570 = vunpack.c.l.b16 %v2374
    %v2571 = vunpack.c.h.b16 %v2374
    %v2572 = vunpack.c.l.b16 %v2375
    %v2573 = vunpack.c.h.b16 %v2375
    %v2574 = vunpack.c.l.b16 %v2376
    %v2575 = vunpack.c.h.b16 %v2376
    %v2576 = vunpack.c.l.b16 %v2377
    %v2577 = vunpack.c.h.b16 %v2377
    %v2578 = vunpack.c.l.b16 %v2378
    %v2579 = vunpack.c.h.b16 %v2378
    %v2580 = vunpack.c.l.b16 %v2379
    %v2581 = vunpack.c.h.b16 %v2379
    %v2582 = vunpack.c.l.b16 %v2380
    %v2583 = vunpack.c.h.b16 %v2380
    %v2584 = vunpack.c.l.b16 %v2381
    %v2585 = vunpack.c.h.b16 %v2381
    %v2586 = vpack.c.b16 %v2460, %v2458
    %v2587 = vpack.c.b16 %v2461, %v2459
    %v2588 = vpack.c.b16 %v2464, %v2462
    %v2589 = vpack.c.b16 %v2465, %v2463
    %v2590 = vpack.c.b16 %v2468, %v2466
    %v2591 = vpack.c.b16 %v2469, %v2467
    %v2592 = vpack.c.b16 %v2472, %v2470
    %v2593 = vpack.c.b16 %v2473, %v2471
    %v2594 = vpack.c.b16 %v2476, %v2474
    %v2595 = vpack.c.b16 %v2477, %v2475
    %v2596 = vpack.c.b16 %v2480, %v2478
    %v2597 = vpack.c.b16 %v2481, %v2479
    %v2598 = vpack.c.b16 %v2484, %v2482
    %v2599 = vpack.c.b16 %v2485, %v2483
    %v2600 = vpack.c.b16 %v2488, %v2486
    %v2601 = vpack.c.b16 %v2489, %v2487
    %v2602 = vpack.c.b16 %v2492, %v2490
    %v2603 = vpack.c.b16 %v2493, %v2491
    %v2604 = vpack.c.b16 %v2496, %v2494
    %v2605 = vpack.c.b16 %v2497, %v2495
    %v2606 = vpack.c.b16 %v2500, %v2498
    %v2607 = vpack.c.b16 %v2501, %v2499
    %v2608 = vpack.c.b16 %v2504, %v2502
    %v2609 = vpack.c.b16 %v2505, %v2503
    %v2610 = vpack.c.b16 %v2508, %v2506
    %v2611 = vpack.c.b16 %v2509, %v2507
    %v2612 = vpack.c.b16 %v2512, %v2510
    %v2613 = vpack.c.b16 %v2513, %v2511
    %v2614 = vpack.c.b16 %v2516, %v2514
    %v2615 = vpack.c.b16 %v2517, %v2515
    %v2616 = vpack.c.b16 %v2520, %v2518
    %v2617 = vpack.c.b16 %v2521, %v2519
    %v2618 = vpack.c.b16 %v2524, %v2522
    %v2619 = vpack.c.b16 %v2525, %v2523
    %v2620 = vpack.c.b16 %v2528, %v2526
    %v2621 = vpack.c.b16 %v2529, %v2527
    %v2622 = vpack.c.b16 %v2532, %v2530
    %v2623 = vpack.c.b16 %v2533, %v2531
    %v2624 = vpack.c.b16 %v2536, %v2534
    %v2625 = vpack.c.b16 %v2537, %v2535
    %v2626 = vpack.c.b16 %v2540, %v2538
    %v2627 = vpack.c.b16 %v2541, %v2539
    %v2628 = vpack.c.b16 %v2544, %v2542
    %v2629 = vpack.c.b16 %v2545, %v2543
    %v2630 = vpack.c.b16 %v2548, %v2546
    %v2631 = vpack.c.b16 %v2549, %v2547
    %v2632 = vpack.c.b16 %v2552, %v2550
    %v2633 = vpack.c.b16 %v2553, %v2551
    %v2634 = vpack.c.b16 %v2556, %v2554
    %v2635 = vpack.c.b16 %v2557, %v2555
    %v2636 = vpack.c.b16 %v2560, %v2558
    %v2637 = vpack.c.b16 %v2561, %v2559
    %v2638 = vpack.c.b16 %v2564, %v2562
    %v2639 = vpack.c.b16 %v2565, %v2563
    %v2640 = vpack.c.b16 %v2568, %v2566
    %v2641 = vpack.c.b16 %v2569, %v2567
    %v2642 = vpack.c.b16 %v2572, %v2570
    %v2643 = vpack.c.b16 %v2573, %v2571
    %v2644 = vpack.c.b16 %v2576, %v2574
    %v2645 = vpack.c.b16 %v2577, %v2575
    %v2646 = vpack.c.b16 %v2580, %v2578
    %v2647 = vpack.c.b16 %v2581, %v2579
    %v2648 = vpack.c.b16 %v2584, %v2582
    %v2649 = vpack.c.b16 %v2585, %v2583
    %2714 = vmatprep.subr.bf16.mxu0 %v2587
    %2715 = vmatpush1.bf16.msra.mxu0 %v2586
    %2716 = vmatprep.subr.bf16.mxu0 %v2589
    %2717 = vmatpush1.bf16.msra.mxu0 %v2588
    %2718 = vmatprep.subr.bf16.mxu0 %v2591
    %2719 = vmatpush1.bf16.msra.mxu0 %v2590
    %2720 = vmatprep.subr.bf16.mxu0 %v2593
    %2721 = vmatpush1.bf16.msra.mxu0 %v2592
    %2722 = vmatprep.subr.bf16.mxu0 %v2595
    %2723 = vmatpush1.bf16.msra.mxu0 %v2594
    %2724 = vmatprep.subr.bf16.mxu0 %v2597
    %2725 = vmatpush1.bf16.msra.mxu0 %v2596
    %2726 = vmatprep.subr.bf16.mxu0 %v2599
    %2727 = vmatpush1.bf16.msra.mxu0 %v2598
    %2728 = vmatprep.subr.bf16.mxu0 %v2601
    %2729 = vmatpush1.bf16.msra.mxu0 %v2600
    %2730 = vmatprep.subr.bf16.mxu0 %v2603
    %2731 = vmatpush1.bf16.msra.mxu0 %v2602
    %2732 = vmatprep.subr.bf16.mxu0 %v2605
    %2733 = vmatpush1.bf16.msra.mxu0 %v2604
    %2734 = vmatprep.subr.bf16.mxu0 %v2607
    %2735 = vmatpush1.bf16.msra.mxu0 %v2606
    %2736 = vmatprep.subr.bf16.mxu0 %v2609
    %2737 = vmatpush1.bf16.msra.mxu0 %v2608
    %2738 = vmatprep.subr.bf16.mxu0 %v2611
    %2739 = vmatpush1.bf16.msra.mxu0 %v2610
    %2740 = vmatprep.subr.bf16.mxu0 %v2613
    %2741 = vmatpush1.bf16.msra.mxu0 %v2612
    %2742 = vmatprep.subr.bf16.mxu0 %v2615
    %2743 = vmatpush1.bf16.msra.mxu0 %v2614
    %2744 = vmatprep.subr.bf16.mxu0 %v2617
    %2745 = vmatpush1.bf16.msra.mxu0 %v2616
    %2746 = vmatprep.mubr.bf16.mxu0 %v2315
    %2747 = vmatmul.mubr.bf16.gmra.mrb[0].mxu0 %v2314
    %v2748 = vpop.f32.mrb[0].mxu0
    %v2749 = vadd.f32 %v2387, %v2748
    %v2750 = vpop.f32.mrb[0].mxu0
    %v2751 = vadd.f32 %v2391, %v2750
    %v2752 = vpop.f32.mrb[0].mxu0
    %v2753 = vpop.f32.mrb[0].mxu0
    %2754 = vdwg.mxu0
    %2755 = vmatprep.subr.bf16.mxu0 %v2619
    %2756 = vmatpush1.bf16.msra.mxu0 %v2618
    %2757 = vmatprep.subr.bf16.mxu0 %v2621
    %2758 = vmatpush1.bf16.msra.mxu0 %v2620
    %2759 = vmatprep.subr.bf16.mxu0 %v2623
    %2760 = vmatpush1.bf16.msra.mxu0 %v2622
    %2761 = vmatprep.subr.bf16.mxu0 %v2625
    %2762 = vmatpush1.bf16.msra.mxu0 %v2624
    %2763 = vmatprep.subr.bf16.mxu0 %v2627
    %2764 = vmatpush1.bf16.msra.mxu0 %v2626
    %2765 = vmatprep.subr.bf16.mxu0 %v2629
    %2766 = vmatpush1.bf16.msra.mxu0 %v2628
    %2767 = vmatprep.subr.bf16.mxu0 %v2631
    %2768 = vmatpush1.bf16.msra.mxu0 %v2630
    %2769 = vmatprep.subr.bf16.mxu0 %v2633
    %2770 = vmatpush1.bf16.msra.mxu0 %v2632
    %2771 = vmatprep.subr.bf16.mxu0 %v2635
    %2772 = vmatpush1.bf16.msra.mxu0 %v2634
    %2773 = vmatprep.subr.bf16.mxu0 %v2637
    %2774 = vmatpush1.bf16.msra.mxu0 %v2636
    %2775 = vmatprep.subr.bf16.mxu0 %v2639
    %2776 = vmatpush1.bf16.msra.mxu0 %v2638
    %2777 = vmatprep.subr.bf16.mxu0 %v2641
    %2778 = vmatpush1.bf16.msra.mxu0 %v2640
    %2779 = vmatprep.subr.bf16.mxu0 %v2643
    %2780 = vmatpush1.bf16.msra.mxu0 %v2642
    %2781 = vmatprep.subr.bf16.mxu0 %v2645
    %2782 = vmatpush1.bf16.msra.mxu0 %v2644
    %2783 = vmatprep.subr.bf16.mxu0 %v2647
    %2784 = vmatpush1.bf16.msra.mxu0 %v2646
    %2785 = vmatprep.subr.bf16.mxu0 %v2649
    %2786 = vmatpush1.bf16.msra.mxu0 %v2648
    %2787 = vmatprep.mubr.bf16.mxu0 %v2317
    %2788 = vmatmul.mubr.bf16.gmra.mrb[0].mxu0 %v2316
    %v2789 = vpop.f32.mrb[0].mxu0
    %v2790 = vadd.f32 %v2749, %v2789
    %v2791 = vpop.f32.mrb[0].mxu0
    %v2792 = vadd.f32 %v2751, %v2791
    %v2793 = vpop.f32.mrb[0].mxu0
    %v2794 = vpop.f32.mrb[0].mxu0
    %2795 = vdwg.mxu0
    %v2796 = vmax.f32 %v2790, 0.0
    %v2797 = vmax.f32 %v2792, 0.0
    %v2798 = vpack.c.bf16 %v2796, %v2796
    %v2799 = vpack.c.bf16 %v2797, %v2797
    %v2800 = vld [vmem:[#allocation9] sm:$0xf]
    %v2801 = vld [vmem:[#allocation9 + $0x4] sm:$0xf]
    %v2802 = vld [vmem:[#allocation9 + $0x8] sm:$0xf]
    %v2803 = vld [vmem:[#allocation9 + $0xc] sm:$0xf]
    %v2804 = vld [vmem:[#allocation9 + $0x10] sm:$0xf]
    %v2805 = vld [vmem:[#allocation9 + $0x14] sm:$0xf]
    %v2806 = vld [vmem:[#allocation9 + $0x18] sm:$0xf]
    %v2807 = vld [vmem:[#allocation9 + $0x1c] sm:$0xf]
    %v2808 = vld [vmem:[#allocation9 + $0x20] sm:$0xf]
    %v2809 = vld [vmem:[#allocation9 + $0x24] sm:$0xf]
    %v2810 = vld [vmem:[#allocation9 + $0x28] sm:$0xf]
    %v2811 = vld [vmem:[#allocation9 + $0x2c] sm:$0xf]
    %v2812 = vld [vmem:[#allocation9 + $0x30] sm:$0xf]
    %v2813 = vld [vmem:[#allocation9 + $0x34] sm:$0xf]
    %v2814 = vld [vmem:[#allocation9 + $0x38] sm:$0xf]
    %v2815 = vld [vmem:[#allocation9 + $0x3c] sm:$0xf]
    %v2816 = vld [vmem:[#allocation9 + $0x40] sm:$0xf]
    %v2817 = vld [vmem:[#allocation9 + $0x44] sm:$0xf]
    %v2818 = vld [vmem:[#allocation9 + $0x48] sm:$0xf]
    %v2819 = vld [vmem:[#allocation9 + $0x4c] sm:$0xf]
    %v2820 = vld [vmem:[#allocation9 + $0x50] sm:$0xf]
    %v2821 = vld [vmem:[#allocation9 + $0x54] sm:$0xf]
    %v2822 = vld [vmem:[#allocation9 + $0x58] sm:$0xf]
    %v2823 = vld [vmem:[#allocation9 + $0x5c] sm:$0xf]
    %v2824 = vld [vmem:[#allocation9 + $0x60] sm:$0xf]
    %v2825 = vld [vmem:[#allocation9 + $0x64] sm:$0xf]
    %v2826 = vld [vmem:[#allocation9 + $0x68] sm:$0xf]
    %v2827 = vld [vmem:[#allocation9 + $0x6c] sm:$0xf]
    %v2828 = vld [vmem:[#allocation9 + $0x70] sm:$0xf]
    %v2829 = vld [vmem:[#allocation9 + $0x74] sm:$0xf]
    %v2830 = vld [vmem:[#allocation9 + $0x78] sm:$0xf]
    %v2831 = vld [vmem:[#allocation9 + $0x7c] sm:$0xf]
    %v2832 = vld [vmem:[%s8] sm:$0x1]
    %v2834 = vlaneseq
    %v2835 = vshrl.u32 %v2834, 7
    %v2836 = vsub.s32 0, %v2835
    %v2837 = vrot.slane %v2832, %v2836
    %v2871 = vunpack.c.l.b16 %v2800
    %v2872 = vunpack.c.l.b16 %v2801
    %v2873 = vunpack.c.l.b16 %v2802
    %v2874 = vunpack.c.l.b16 %v2803
    %v2875 = vunpack.c.l.b16 %v2804
    %v2876 = vunpack.c.l.b16 %v2805
    %v2877 = vunpack.c.l.b16 %v2806
    %v2878 = vunpack.c.l.b16 %v2807
    %v2879 = vunpack.c.l.b16 %v2808
    %v2880 = vunpack.c.l.b16 %v2809
    %v2881 = vunpack.c.l.b16 %v2810
    %v2882 = vunpack.c.l.b16 %v2811
    %v2883 = vunpack.c.l.b16 %v2812
    %v2884 = vunpack.c.l.b16 %v2813
    %v2885 = vunpack.c.l.b16 %v2814
    %v2886 = vunpack.c.l.b16 %v2815
    %v2887 = vunpack.c.l.b16 %v2816
    %v2888 = vunpack.c.l.b16 %v2817
    %v2889 = vunpack.c.l.b16 %v2818
    %v2890 = vunpack.c.l.b16 %v2819
    %v2891 = vunpack.c.l.b16 %v2820
    %v2892 = vunpack.c.l.b16 %v2821
    %v2893 = vunpack.c.l.b16 %v2822
    %v2894 = vunpack.c.l.b16 %v2823
    %v2895 = vunpack.c.l.b16 %v2824
    %v2896 = vunpack.c.l.b16 %v2825
    %v2897 = vunpack.c.l.b16 %v2826
    %v2898 = vunpack.c.l.b16 %v2827
    %v2899 = vunpack.c.l.b16 %v2828
    %v2900 = vunpack.c.l.b16 %v2829
    %v2901 = vunpack.c.l.b16 %v2830
    %v2902 = vunpack.c.l.b16 %v2831
    %v2903 = vpack.c.b16 %v2872, %v2871
    %v2904 = vpack.c.b16 %v2874, %v2873
    %v2905 = vpack.c.b16 %v2876, %v2875
    %v2906 = vpack.c.b16 %v2878, %v2877
    %v2907 = vpack.c.b16 %v2880, %v2879
    %v2908 = vpack.c.b16 %v2882, %v2881
    %v2909 = vpack.c.b16 %v2884, %v2883
    %v2910 = vpack.c.b16 %v2886, %v2885
    %v2911 = vpack.c.b16 %v2888, %v2887
    %v2912 = vpack.c.b16 %v2890, %v2889
    %v2913 = vpack.c.b16 %v2892, %v2891
    %v2914 = vpack.c.b16 %v2894, %v2893
    %v2915 = vpack.c.b16 %v2896, %v2895
    %v2916 = vpack.c.b16 %v2898, %v2897
    %v2917 = vpack.c.b16 %v2900, %v2899
    %v2918 = vpack.c.b16 %v2902, %v2901
    %2935 = vmatprep.subr.bf16.mxu0 0
    %2936 = vmatpush1.bf16.msra.mxu0 %v2903
    %2937 = vmatprep.subr.bf16.mxu0 0
    %2938 = vmatpush1.bf16.msra.mxu0 %v2904
    %2939 = vmatprep.subr.bf16.mxu0 0
    %2940 = vmatpush1.bf16.msra.mxu0 %v2905
    %2941 = vmatprep.subr.bf16.mxu0 0
    %2942 = vmatpush1.bf16.msra.mxu0 %v2906
    %2943 = vmatprep.subr.bf16.mxu0 0
    %2944 = vmatpush1.bf16.msra.mxu0 %v2907
    %2945 = vmatprep.subr.bf16.mxu0 0
    %2946 = vmatpush1.bf16.msra.mxu0 %v2908
    %2947 = vmatprep.subr.bf16.mxu0 0
    %2948 = vmatpush1.bf16.msra.mxu0 %v2909
    %2949 = vmatprep.subr.bf16.mxu0 0
    %2950 = vmatpush1.bf16.msra.mxu0 %v2910
    %2951 = vmatprep.subr.bf16.mxu0 0
    %2952 = vmatpush1.bf16.msra.mxu0 %v2911
    %2953 = vmatprep.subr.bf16.mxu0 0
    %2954 = vmatpush1.bf16.msra.mxu0 %v2912
    %2955 = vmatprep.subr.bf16.mxu0 0
    %2956 = vmatpush1.bf16.msra.mxu0 %v2913
    %2957 = vmatprep.subr.bf16.mxu0 0
    %2958 = vmatpush1.bf16.msra.mxu0 %v2914
    %2959 = vmatprep.subr.bf16.mxu0 0
    %2960 = vmatpush1.bf16.msra.mxu0 %v2915
    %2961 = vmatprep.subr.bf16.mxu0 0
    %2962 = vmatpush1.bf16.msra.mxu0 %v2916
    %2963 = vmatprep.subr.bf16.mxu0 0
    %2964 = vmatpush1.bf16.msra.mxu0 %v2917
    %2965 = vmatprep.subr.bf16.mxu0 0
    %2966 = vmatpush1.bf16.msra.mxu0 %v2918
    %2967 = vmatprep.mubr.bf16.mxu0 %v2799
    %2968 = vmatmul.mubr.bf16.gmra.mrb[0].mxu0 %v2798
    %v2969 = vpop.f32.mrb[0].mxu0
    %v2970 = vadd.f32 %v2837, %v2969
    %v2971 = vpop.f32.mrb[0].mxu0
    %v2972 = vpop.f32.mrb[0].mxu0
    %v2973 = vpop.f32.mrb[0].mxu0
    %2974 = vdwg.mxu0
    %v2975 = vtanh.pop %v2970
    %2976 = vst [vmem:[%s9] sm:$0xff] %v2975
    // Predicated region
    $region58: #{actor_forward.1} parent=1 // pred_check
      _
    $region59: #{actor_forward.1} parent=1 // pred_check_branch
      %2978 = sbr.rel (0) target = $region61
    $region60: #{actor_forward.1} parent=1 // pred_region
      _
    $region61: #{actor_forward.1} parent=1 // pred_fallthru
      _
    // Predicated region
    $region62: #{actor_forward.1} parent=1 // pred_check
      _
    $region63: #{actor_forward.1} parent=1 // pred_check_branch
      %2980 = sbr.rel (0) target = $region65
    $region64: #{actor_forward.1} parent=1 // pred_region
      _
    $region65: #{actor_forward.1} parent=1 // pred_fallthru
      _
    %2981 = vsyncpa [#allocation3], 1
    %2982 = vsyncpa [#allocation5], 1
    %2983 = vsyncpa [#allocation8], 1

</llo_original>
